<compile_context>
chip_gen: v6e
topology: v6e:2x2x1
jax: 0.10.0
libtpu: 0.0.40
codegen_flags: <defaults>
</compile_context>

<pallas_src>
import functools

import jax
import jax.numpy as jnp
from jax import lax
from jax.experimental import pallas as pl
from jax.experimental.pallas import tpu as pltpu


def _gelu(x):
    # tanh approximation of GELU.
    c = 0.7978845608028654  # sqrt(2/pi)
    return 0.5 * x * (1.0 + jnp.tanh(c * (x + 0.044715 * x * x * x)))


def _spatial_decom_kernel(x_ref, wv_ref, bv_ref, mb_ref, mask_ref,
                          w1a_ref, w1d_ref, b1_ref, w2_ref, b2_ref,
                          bns_ref, bnb_ref, o_ref, *, tb, n, f, head_num):
    # x_ref: (TB, N, F) f32 slab block.  All weights are full-extent,
    # VMEM-resident blocks (constant index maps -> DMA'd once).
    x3 = x_ref[...]                                   # (TB, N, F) f32
    x2 = x3.reshape(tb * n, f)                        # (TB*N, F)  f32 (leading merge)
    xb = x2.astype(jnp.bfloat16)                      # bf16 MXU operand

    # ---- value linear (bf16 MXU, f32 accumulate) ----
    v2 = jnp.dot(xb, wv_ref[...], preferred_element_type=jnp.float32) + bv_ref[...]
    v3 = v2.reshape(tb, n, f)                         # (TB, N, F) f32

    # ---- per-head node->core->node mixing as ONE batched matmul ----
    # mb_ref: (TB, H*N, N) per-slab copy of the stacked mixing operators.
    # mix_all[b, h*N + m, c] = sum_n M[h, m, n] * v[b, n, c]
    mix_all = lax.dot_general(
        mb_ref[...], v3,
        dimension_numbers=(((2,), (1,)), ((0,), (0,))),
        preferred_element_type=jnp.float32)           # (TB, H*N, F)

    # Head selection: output channel c keeps the copy mixed with its own head's
    # operator (mask_ref[h] is (N, F) with ones on head h's channels).
    vmix3 = mix_all[:, 0:n, :] * mask_ref[0]
    for h in range(1, head_num):
        vmix3 = vmix3 + mix_all[:, h * n:(h + 1) * n, :] * mask_ref[h]
    vmix2 = vmix3.reshape(tb * n, f)                  # (TB*N, F) f32

    # ---- FFN (2F -> 8F -> F) with the concat folded away:
    #      concat([x - v, v]) @ W1 == x @ W1a + v @ (W1b - W1a)
    h1 = (jnp.dot(xb, w1a_ref[...], preferred_element_type=jnp.float32)
          + jnp.dot(vmix2.astype(jnp.bfloat16), w1d_ref[...],
                    preferred_element_type=jnp.float32)
          + b1_ref[...])
    g = _gelu(h1)                                     # (TB*N, 8F) f32
    o2 = (jnp.dot(g.astype(jnp.bfloat16), w2_ref[...],
                  preferred_element_type=jnp.float32)
          + b2_ref[...] + x2)                         # residual in f32

    # ---- inference-mode BatchNorm2d folded into a per-channel affine ----
    o2 = o2 * bns_ref[...] + bnb_ref[...]
    o_ref[...] = o2.reshape(tb, n, f).astype(o_ref.dtype)


def _pick_tb(bt, n, row_target=512):
    """Largest divisor of bt with <= row_target/n slabs while keeping grid >= 2."""
    cap = max(1, row_target // max(n, 1))
    best = 1
    for cand in range(1, min(bt, cap) + 1):
        if bt % cand == 0 and bt // cand >= 2:
            best = cand
    return best


def spatial_decom_forward(x, params, *, row_target=512):
    """x: (B, T, N, F) float32 -> (B, T, N, F) float32."""
    b, t, n, f = x.shape
    adaptive = params["adaptive"]              # (H, d_head, N)
    cores = params["cores"]                    # (H, C, d_head)
    head_num, d_head, n_ = adaptive.shape
    assert n_ == n
    assert head_num * d_head == f, "Spatial_decom requires d_core == d_in"

    # ---- tiny parameter-only preprocessing (plain-JAX glue) ----
    aff = jnp.einsum("hcd,hdn->hcn", cores, adaptive,
                     precision=lax.Precision.HIGHEST) / (d_head ** 0.5)   # (H, C, N)
    s1 = jax.nn.softmax(aff, axis=-1)                                     # nodes -> cores
    s2 = jax.nn.softmax(aff, axis=-2)                                     # cores -> nodes
    # Combined per-head node->core->node operator: M[h] = s2[h]^T @ s1[h]  (N, N)
    mmix = jnp.einsum("hcm,hcn->hmn", s2, s1, precision=lax.Precision.HIGHEST)
    mstack = mmix.reshape(head_num * n, n).astype(jnp.float32)            # (H*N, N)

    bn_scale = (params["bn_gamma"] / jnp.sqrt(params["bn_var"] + 1e-5)).reshape(1, f)
    bn_shift = (params["bn_beta"] - params["bn_mean"] * bn_scale[0]).reshape(1, f)
    bn_scale = bn_scale.astype(jnp.float32)
    bn_shift = bn_shift.astype(jnp.float32)

    w1 = params["w1"]                          # (2F, 8F)
    hidden = w1.shape[1]
    w1a = w1[:f]
    w1d = w1[f:] - w1[:f]                      # concat([x-v, v]) @ W1 == x@W1a + v@W1d

    # bf16 weights for the MXU (accumulation stays f32 inside the kernel).
    wv_b = params["wv"].astype(jnp.bfloat16)
    w1a_b = w1a.astype(jnp.bfloat16)
    w1d_b = w1d.astype(jnp.bfloat16)
    w2_b = params["w2"].astype(jnp.bfloat16)

    bv = params["bv"].reshape(1, f).astype(jnp.float32)
    b1 = params["b1"].reshape(1, hidden).astype(jnp.float32)
    b2 = params["b2"].reshape(1, f).astype(jnp.float32)

    bt = b * t
    tb = _pick_tb(bt, n, row_target)
    grid = bt // tb

    # Per-slab broadcast of the stacked mixing operator (batch dim for the
    # in-kernel dot_general) and the head-selection channel mask.
    mb = jnp.broadcast_to(mstack[None], (tb, head_num * n, n)).astype(jnp.float32)
    head_id = jnp.arange(f, dtype=jnp.int32) // d_head                    # (F,)
    mask = (head_id[None, :] == jnp.arange(head_num, dtype=jnp.int32)[:, None])
    mask = jnp.broadcast_to(mask.astype(jnp.float32)[:, None, :],
                            (head_num, n, f))                             # (H, N, F)

    xf = x.reshape(bt, n, f)

    kernel = functools.partial(_spatial_decom_kernel,
                               tb=tb, n=n, f=f, head_num=head_num)

    flops = bt * (2 * n * f * f                        # value linear
                  + 2 * head_num * n * n * f           # stacked mixing matmul
                  + 4 * n * f * hidden                 # FFN1 (x@W1a + v@W1d)
                  + 2 * n * hidden * f)                # FFN2
    bytes_accessed = (4 * 2 * xf.size
                      + 2 * (wv_b.size + w1a_b.size + w1d_b.size + w2_b.size)
                      + 4 * (mb.size + mask.size + 4 * f + hidden))

    # NOTE(v7x @ larger F): add pipeline_mode=pl.Buffered(1) on the weight specs
    # and/or raise vmem_limit_bytes if F/hidden grow; at F=32 VMEM use is <1 MiB.
    out = pl.pallas_call(
        kernel,
        out_shape=jax.ShapeDtypeStruct((bt, n, f), x.dtype),
        grid_spec=pltpu.PrefetchScalarGridSpec(
            num_scalar_prefetch=0,
            grid=(grid,),
            in_specs=[
                pl.BlockSpec((tb, n, f), lambda i: (i, 0, 0)),                # x slab block
                pl.BlockSpec((f, f), lambda i: (0, 0)),                       # Wv (bf16)
                pl.BlockSpec((1, f), lambda i: (0, 0)),                       # bv
                pl.BlockSpec((tb, head_num * n, n), lambda i: (0, 0, 0)),     # mixing operator
                pl.BlockSpec((head_num, n, f), lambda i: (0, 0, 0)),          # head mask
                pl.BlockSpec((f, hidden), lambda i: (0, 0)),                  # W1a (bf16)
                pl.BlockSpec((f, hidden), lambda i: (0, 0)),                  # W1b - W1a (bf16)
                pl.BlockSpec((1, hidden), lambda i: (0, 0)),                  # b1
                pl.BlockSpec((hidden, f), lambda i: (0, 0)),                  # W2 (bf16)
                pl.BlockSpec((1, f), lambda i: (0, 0)),                       # b2
                pl.BlockSpec((1, f), lambda i: (0, 0)),                       # BN scale
                pl.BlockSpec((1, f), lambda i: (0, 0)),                       # BN shift
            ],
            out_specs=pl.BlockSpec((tb, n, f), lambda i: (i, 0, 0)),
        ),
        compiler_params=pltpu.CompilerParams(
            dimension_semantics=("parallel",),
        ),
        cost_estimate=pl.CostEstimate(
            flops=int(flops),
            transcendentals=int(bt * n * hidden),
            bytes_accessed=int(bytes_accessed),
        ),
    )(xf, wv_b, bv, mb, mask, w1a_b, w1d_b, b1, w2_b, b2, bn_scale, bn_shift)

    return out.reshape(b, t, n, f)


def _reference(x, params):
    """Pure-JAX reference mirroring the PyTorch forward (inference mode)."""
    b, t, n, f = x.shape
    adaptive = params["adaptive"]
    cores = params["cores"]
    h, dh, _ = adaptive.shape

    v = jnp.einsum("btnf,fg->btng", x, params["wv"],
                   precision=lax.Precision.HIGHEST) + params["bv"]
    # stack(split(v, d_head, -1), dim=2).transpose(-1, -2)
    v = v.reshape(b, t, n, h, dh)
    v = jnp.transpose(v, (0, 1, 3, 4, 2))                              # (b,t,h,dh,n)

    aff = jnp.einsum("hcd,hdn->hcn", cores, adaptive,
                     precision=lax.Precision.HIGHEST) / (dh ** 0.5)
    s1 = jax.nn.softmax(aff, axis=-1)
    s2 = jax.nn.softmax(aff, axis=-2)
    v = jnp.einsum("bthfn,hcn->bthfc", v, s1, precision=lax.Precision.HIGHEST)
    v = jnp.einsum("bthfc,hcn->bthfn", v, s2, precision=lax.Precision.HIGHEST)
    v = v.reshape(b, t, f, n)
    v = jnp.transpose(v, (0, 1, 3, 2))                                 # (b,t,n,f)

    u = jnp.concatenate([x - v, v], axis=-1)
    h1 = jnp.einsum("btnf,fg->btng", u, params["w1"],
                    precision=lax.Precision.HIGHEST) + params["b1"]
    g = _gelu(h1)
    out = jnp.einsum("btnf,fg->btng", g, params["w2"],
                     precision=lax.Precision.HIGHEST) + params["b2"] + x

    scale = params["bn_gamma"] / jnp.sqrt(params["bn_var"] + 1e-5)
    return (out - params["bn_mean"]) * scale + params["bn_beta"]


if __name__ == "__main__":
    key = jax.random.PRNGKey(0)
    b, t, n = 2, 4, 16
    d_in = d_core = 32
    head_num, core_num = 4, 8
    d_head = d_core // head_num
    f = d_in

    ks = jax.random.split(key, 12)
    params = {
        "adaptive": jax.random.normal(ks[0], (head_num, d_head, n), jnp.float32),
        "cores": jax.random.normal(ks[1], (head_num, core_num, d_head), jnp.float32),
        "wv": jax.random.normal(ks[2], (f, f), jnp.float32) / (f ** 0.5),
        "bv": 0.1 * jax.random.normal(ks[3], (f,), jnp.float32),
        "w1": jax.random.normal(ks[4], (2 * f, 8 * f), jnp.float32) / ((2 * f) ** 0.5),
        "b1": 0.1 * jax.random.normal(ks[5], (8 * f,), jnp.float32),
        "w2": jax.random.normal(ks[6], (8 * f, f), jnp.float32) / ((8 * f) ** 0.5),
        "b2": 0.1 * jax.random.normal(ks[7], (f,), jnp.float32),
        "bn_gamma": 1.0 + 0.1 * jax.random.normal(ks[8], (f,), jnp.float32),
        "bn_beta": 0.1 * jax.random.normal(ks[9], (f,), jnp.float32),
        "bn_mean": 0.1 * jax.random.normal(ks[10], (f,), jnp.float32),
        "bn_var": jnp.abs(jax.random.normal(ks[11], (f,), jnp.float32)) + 0.5,
    }
    x = jax.random.normal(jax.random.PRNGKey(1), (b, t, n, f), jnp.float32)

    out = jax.jit(spatial_decom_forward)(x, params)
    out = jax.block_until_ready(out)

    ref = _reference(x, params)
    assert out.shape == ref.shape, (out.shape, ref.shape)
    max_diff = float(jnp.max(jnp.abs(out - ref)))
    # Tolerance sized for bf16 MXU operands (f32 accumulation) + tanh GELU.
    assert jnp.allclose(out, ref, atol=3e-2, rtol=3e-2), \
        f"mismatch vs reference, max|diff|={max_diff}"

    print("KERNEL_OK")
</pallas_src>

<mosaic_0001>
module attributes {stable_mosaic.version = 11 : i64} {
  func.func @_spatial_decom_kernel(%arg0: i32, %arg1: memref<4x16x32xf32, #tpu.memory_space<vmem>>, %arg2: memref<32x32xbf16, #tpu.memory_space<vmem>>, %arg3: memref<1x32xf32, #tpu.memory_space<vmem>>, %arg4: memref<4x64x16xf32, #tpu.memory_space<vmem>>, %arg5: memref<4x16x32xf32, #tpu.memory_space<vmem>>, %arg6: memref<32x256xbf16, #tpu.memory_space<vmem>>, %arg7: memref<32x256xbf16, #tpu.memory_space<vmem>>, %arg8: memref<1x256xf32, #tpu.memory_space<vmem>>, %arg9: memref<256x32xbf16, #tpu.memory_space<vmem>>, %arg10: memref<1x32xf32, #tpu.memory_space<vmem>>, %arg11: memref<1x32xf32, #tpu.memory_space<vmem>>, %arg12: memref<1x32xf32, #tpu.memory_space<vmem>>, %arg13: memref<4x16x32xf32, #tpu.memory_space<vmem>>) attributes {dimension_semantics = [#tpu.dimension_semantics<parallel>], iteration_bounds = array<i64: 2>, scalar_prefetch = 0 : i64, scratch_operands = 0 : i64, tpu.core_type = #tpu.core_type<tc>, window_params = [{transform_indices = @transform_0, window_bounds = array<i64: 4, 16, 32>}, {pipeline_mode = #tpu.pipeline_mode<synchronous>, transform_indices = @transform_1, window_bounds = array<i64: 32, 32>}, {pipeline_mode = #tpu.pipeline_mode<synchronous>, transform_indices = @transform_2, window_bounds = array<i64: 1, 32>}, {pipeline_mode = #tpu.pipeline_mode<synchronous>, transform_indices = @transform_3, window_bounds = array<i64: 4, 64, 16>}, {pipeline_mode = #tpu.pipeline_mode<synchronous>, transform_indices = @transform_4, window_bounds = array<i64: 4, 16, 32>}, {pipeline_mode = #tpu.pipeline_mode<synchronous>, transform_indices = @transform_5, window_bounds = array<i64: 32, 256>}, {pipeline_mode = #tpu.pipeline_mode<synchronous>, transform_indices = @transform_6, window_bounds = array<i64: 32, 256>}, {pipeline_mode = #tpu.pipeline_mode<synchronous>, transform_indices = @transform_7, window_bounds = array<i64: 1, 256>}, {pipeline_mode = #tpu.pipeline_mode<synchronous>, transform_indices = @transform_8, window_bounds = array<i64: 256, 32>}, {pipeline_mode = #tpu.pipeline_mode<synchronous>, transform_indices = @transform_9, window_bounds = array<i64: 1, 32>}, {pipeline_mode = #tpu.pipeline_mode<synchronous>, transform_indices = @transform_10, window_bounds = array<i64: 1, 32>}, {pipeline_mode = #tpu.pipeline_mode<synchronous>, transform_indices = @transform_11, window_bounds = array<i64: 1, 32>}, {transform_indices = @transform_12, window_bounds = array<i64: 4, 16, 32>}]} {
    %c0 = arith.constant 0 : index
    %c0_0 = arith.constant 0 : index
    %c0_1 = arith.constant 0 : index
    %0 = vector.load %arg1[%c0, %c0_0, %c0_1] : memref<4x16x32xf32, #tpu.memory_space<vmem>>, vector<4x16x32xf32>
    %1 = vector.shape_cast %0 : vector<4x16x32xf32> to vector<64x32xf32>
    %2 = arith.truncf %1 : vector<64x32xf32> to vector<64x32xbf16>
    %c0_2 = arith.constant 0 : index
    %c0_3 = arith.constant 0 : index
    %3 = vector.load %arg2[%c0_2, %c0_3] : memref<32x32xbf16, #tpu.memory_space<vmem>>, vector<32x32xbf16>
    %cst = arith.constant dense<0.000000e+00> : vector<64x32xf32>
    %4 = tpu.matmul %2, %3, %cst {dimension_numbers = #tpu.dot_dimension_numbers<[1], [0], [0], [1], [0, 0, 1, 1], [], []>} : vector<64x32xbf16>, vector<32x32xbf16>, vector<64x32xf32> -> vector<64x32xf32>
    %c0_4 = arith.constant 0 : index
    %c0_5 = arith.constant 0 : index
    %5 = vector.load %arg3[%c0_4, %c0_5] : memref<1x32xf32, #tpu.memory_space<vmem>>, vector<1x32xf32>
    %6 = vector.broadcast %5 : vector<1x32xf32> to vector<64x32xf32>
    %7 = arith.addf %4, %6 : vector<64x32xf32>
    %8 = vector.shape_cast %7 : vector<64x32xf32> to vector<4x16x32xf32>
    %c0_6 = arith.constant 0 : index
    %c0_7 = arith.constant 0 : index
    %c0_8 = arith.constant 0 : index
    %9 = vector.load %arg4[%c0_6, %c0_7, %c0_8] : memref<4x64x16xf32, #tpu.memory_space<vmem>>, vector<4x64x16xf32>
    %cst_9 = arith.constant dense<0.000000e+00> : vector<4x64x32xf32>
    %10 = tpu.matmul %9, %8, %cst_9 {dimension_numbers = #tpu.dot_dimension_numbers<[2], [1], [1], [2], [0, 0, 0, 1, 1, 2], [0], [0]>} : vector<4x64x16xf32>, vector<4x16x32xf32>, vector<4x64x32xf32> -> vector<4x64x32xf32>
    %11 = vector.extract_strided_slice %10 {offsets = [0, 0, 0], sizes = [4, 16, 32], strides = [1, 1, 1]} : vector<4x64x32xf32> to vector<4x16x32xf32>
    %c0_10 = arith.constant 0 : index
    %c0_11 = arith.constant 0 : index
    %c0_12 = arith.constant 0 : index
    %12 = vector.load %arg5[%c0_10, %c0_11, %c0_12] : memref<4x16x32xf32, #tpu.memory_space<vmem>>, vector<1x16x32xf32>
    %13 = vector.shape_cast %12 : vector<1x16x32xf32> to vector<16x32xf32>
    %14 = vector.shape_cast %13 : vector<16x32xf32> to vector<1x16x32xf32>
    %15 = vector.broadcast %14 : vector<1x16x32xf32> to vector<4x16x32xf32>
    %16 = arith.mulf %11, %15 : vector<4x16x32xf32>
    %17 = vector.extract_strided_slice %10 {offsets = [0, 16, 0], sizes = [4, 16, 32], strides = [1, 1, 1]} : vector<4x64x32xf32> to vector<4x16x32xf32>
    %c1 = arith.constant 1 : index
    %c0_13 = arith.constant 0 : index
    %c0_14 = arith.constant 0 : index
    %18 = vector.load %arg5[%c1, %c0_13, %c0_14] : memref<4x16x32xf32, #tpu.memory_space<vmem>>, vector<1x16x32xf32>
    %19 = vector.shape_cast %18 : vector<1x16x32xf32> to vector<16x32xf32>
    %20 = vector.shape_cast %19 : vector<16x32xf32> to vector<1x16x32xf32>
    %21 = vector.broadcast %20 : vector<1x16x32xf32> to vector<4x16x32xf32>
    %22 = arith.mulf %17, %21 : vector<4x16x32xf32>
    %23 = arith.addf %16, %22 : vector<4x16x32xf32>
    %24 = vector.extract_strided_slice %10 {offsets = [0, 32, 0], sizes = [4, 16, 32], strides = [1, 1, 1]} : vector<4x64x32xf32> to vector<4x16x32xf32>
    %c2 = arith.constant 2 : index
    %c0_15 = arith.constant 0 : index
    %c0_16 = arith.constant 0 : index
    %25 = vector.load %arg5[%c2, %c0_15, %c0_16] : memref<4x16x32xf32, #tpu.memory_space<vmem>>, vector<1x16x32xf32>
    %26 = vector.shape_cast %25 : vector<1x16x32xf32> to vector<16x32xf32>
    %27 = vector.shape_cast %26 : vector<16x32xf32> to vector<1x16x32xf32>
    %28 = vector.broadcast %27 : vector<1x16x32xf32> to vector<4x16x32xf32>
    %29 = arith.mulf %24, %28 : vector<4x16x32xf32>
    %30 = arith.addf %23, %29 : vector<4x16x32xf32>
    %31 = vector.extract_strided_slice %10 {offsets = [0, 48, 0], sizes = [4, 16, 32], strides = [1, 1, 1]} : vector<4x64x32xf32> to vector<4x16x32xf32>
    %c3 = arith.constant 3 : index
    %c0_17 = arith.constant 0 : index
    %c0_18 = arith.constant 0 : index
    %32 = vector.load %arg5[%c3, %c0_17, %c0_18] : memref<4x16x32xf32, #tpu.memory_space<vmem>>, vector<1x16x32xf32>
    %33 = vector.shape_cast %32 : vector<1x16x32xf32> to vector<16x32xf32>
    %34 = vector.shape_cast %33 : vector<16x32xf32> to vector<1x16x32xf32>
    %35 = vector.broadcast %34 : vector<1x16x32xf32> to vector<4x16x32xf32>
    %36 = arith.mulf %31, %35 : vector<4x16x32xf32>
    %37 = arith.addf %30, %36 : vector<4x16x32xf32>
    %38 = vector.shape_cast %37 : vector<4x16x32xf32> to vector<64x32xf32>
    %c0_19 = arith.constant 0 : index
    %c0_20 = arith.constant 0 : index
    %39 = vector.load %arg6[%c0_19, %c0_20] : memref<32x256xbf16, #tpu.memory_space<vmem>>, vector<32x256xbf16>
    %cst_21 = arith.constant dense<0.000000e+00> : vector<64x256xf32>
    %40 = tpu.matmul %2, %39, %cst_21 {dimension_numbers = #tpu.dot_dimension_numbers<[1], [0], [0], [1], [0, 0, 1, 1], [], []>} : vector<64x32xbf16>, vector<32x256xbf16>, vector<64x256xf32> -> vector<64x256xf32>
    %41 = arith.truncf %38 : vector<64x32xf32> to vector<64x32xbf16>
    %c0_22 = arith.constant 0 : index
    %c0_23 = arith.constant 0 : index
    %42 = vector.load %arg7[%c0_22, %c0_23] : memref<32x256xbf16, #tpu.memory_space<vmem>>, vector<32x256xbf16>
    %cst_24 = arith.constant dense<0.000000e+00> : vector<64x256xf32>
    %43 = tpu.matmul %41, %42, %cst_24 {dimension_numbers = #tpu.dot_dimension_numbers<[1], [0], [0], [1], [0, 0, 1, 1], [], []>} : vector<64x32xbf16>, vector<32x256xbf16>, vector<64x256xf32> -> vector<64x256xf32>
    %44 = arith.addf %40, %43 : vector<64x256xf32>
    %c0_25 = arith.constant 0 : index
    %c0_26 = arith.constant 0 : index
    %45 = vector.load %arg8[%c0_25, %c0_26] : memref<1x256xf32, #tpu.memory_space<vmem>>, vector<1x256xf32>
    %46 = vector.broadcast %45 : vector<1x256xf32> to vector<64x256xf32>
    %47 = arith.addf %44, %46 : vector<64x256xf32>
    %cst_27 = arith.constant 5.000000e-01 : f32
    %48 = vector.broadcast %cst_27 : f32 to vector<64x256xf32>
    %49 = arith.mulf %48, %47 : vector<64x256xf32>
    %cst_28 = arith.constant 4.471500e-02 : f32
    %50 = vector.broadcast %cst_28 : f32 to vector<64x256xf32>
    %51 = arith.mulf %50, %47 : vector<64x256xf32>
    %52 = arith.mulf %51, %47 : vector<64x256xf32>
    %53 = arith.mulf %52, %47 : vector<64x256xf32>
    %54 = arith.addf %47, %53 : vector<64x256xf32>
    %cst_29 = arith.constant 0.797884583 : f32
    %55 = vector.broadcast %cst_29 : f32 to vector<64x256xf32>
    %56 = arith.mulf %55, %54 : vector<64x256xf32>
    %57 = math.tanh %56 : vector<64x256xf32>
    %cst_30 = arith.constant 1.000000e+00 : f32
    %58 = vector.broadcast %cst_30 : f32 to vector<64x256xf32>
    %59 = arith.addf %58, %57 : vector<64x256xf32>
    %60 = arith.mulf %49, %59 : vector<64x256xf32>
    %61 = arith.truncf %60 : vector<64x256xf32> to vector<64x256xbf16>
    %c0_31 = arith.constant 0 : index
    %c0_32 = arith.constant 0 : index
    %62 = vector.load %arg9[%c0_31, %c0_32] : memref<256x32xbf16, #tpu.memory_space<vmem>>, vector<256x32xbf16>
    %cst_33 = arith.constant dense<0.000000e+00> : vector<64x32xf32>
    %63 = tpu.matmul %61, %62, %cst_33 {dimension_numbers = #tpu.dot_dimension_numbers<[1], [0], [0], [1], [0, 0, 1, 1], [], []>} : vector<64x256xbf16>, vector<256x32xbf16>, vector<64x32xf32> -> vector<64x32xf32>
    %c0_34 = arith.constant 0 : index
    %c0_35 = arith.constant 0 : index
    %64 = vector.load %arg10[%c0_34, %c0_35] : memref<1x32xf32, #tpu.memory_space<vmem>>, vector<1x32xf32>
    %65 = vector.broadcast %64 : vector<1x32xf32> to vector<64x32xf32>
    %66 = arith.addf %63, %65 : vector<64x32xf32>
    %67 = arith.addf %66, %1 : vector<64x32xf32>
    %c0_36 = arith.constant 0 : index
    %c0_37 = arith.constant 0 : index
    %68 = vector.load %arg11[%c0_36, %c0_37] : memref<1x32xf32, #tpu.memory_space<vmem>>, vector<1x32xf32>
    %69 = vector.broadcast %68 : vector<1x32xf32> to vector<64x32xf32>
    %70 = arith.mulf %67, %69 : vector<64x32xf32>
    %c0_38 = arith.constant 0 : index
    %c0_39 = arith.constant 0 : index
    %71 = vector.load %arg12[%c0_38, %c0_39] : memref<1x32xf32, #tpu.memory_space<vmem>>, vector<1x32xf32>
    %72 = vector.broadcast %71 : vector<1x32xf32> to vector<64x32xf32>
    %73 = arith.addf %70, %72 : vector<64x32xf32>
    %74 = vector.shape_cast %73 : vector<64x32xf32> to vector<4x16x32xf32>
    %c0_40 = arith.constant 0 : index
    %c0_41 = arith.constant 0 : index
    %c0_42 = arith.constant 0 : index
    %75 = vector.load %arg13[%c0_40, %c0_41, %c0_42] : memref<4x16x32xf32, #tpu.memory_space<vmem>>, vector<4x16x32xf32>
    tpu.vector_store %arg13[%c0_40, %c0_41, %c0_42], %74 {strides = array<i32>} : memref<4x16x32xf32, #tpu.memory_space<vmem>>, vector<4x16x32xf32>,
    return
  }
  func.func @transform_0(%arg0: i32) -> (i32, i32, i32) {
    %c0_i32 = arith.constant 0 : i32
    %c0_i32_0 = arith.constant 0 : i32
    %c0_i32_1 = arith.constant 0 : i32
    return %arg0, %c0_i32, %c0_i32_0 : i32, i32, i32
  }
  func.func @transform_1(%arg0: i32) -> (i32, i32) {
    %c0_i32 = arith.constant 0 : i32
    %c0_i32_0 = arith.constant 0 : i32
    %c0_i32_1 = arith.constant 0 : i32
    return %c0_i32, %c0_i32_0 : i32, i32
  }
  func.func @transform_2(%arg0: i32) -> (i32, i32) {
    %c0_i32 = arith.constant 0 : i32
    %c0_i32_0 = arith.constant 0 : i32
    %c0_i32_1 = arith.constant 0 : i32
    return %c0_i32, %c0_i32_0 : i32, i32
  }
  func.func @transform_3(%arg0: i32) -> (i32, i32, i32) {
    %c0_i32 = arith.constant 0 : i32
    %c0_i32_0 = arith.constant 0 : i32
    %c0_i32_1 = arith.constant 0 : i32
    %c0_i32_2 = arith.constant 0 : i32
    return %c0_i32, %c0_i32_0, %c0_i32_1 : i32, i32, i32
  }
  func.func @transform_4(%arg0: i32) -> (i32, i32, i32) {
    %c0_i32 = arith.constant 0 : i32
    %c0_i32_0 = arith.constant 0 : i32
    %c0_i32_1 = arith.constant 0 : i32
    %c0_i32_2 = arith.constant 0 : i32
    return %c0_i32, %c0_i32_0, %c0_i32_1 : i32, i32, i32
  }
  func.func @transform_5(%arg0: i32) -> (i32, i32) {
    %c0_i32 = arith.constant 0 : i32
    %c0_i32_0 = arith.constant 0 : i32
    %c0_i32_1 = arith.constant 0 : i32
    return %c0_i32, %c0_i32_0 : i32, i32
  }
  func.func @transform_6(%arg0: i32) -> (i32, i32) {
    %c0_i32 = arith.constant 0 : i32
    %c0_i32_0 = arith.constant 0 : i32
    %c0_i32_1 = arith.constant 0 : i32
    return %c0_i32, %c0_i32_0 : i32, i32
  }
  func.func @transform_7(%arg0: i32) -> (i32, i32) {
    %c0_i32 = arith.constant 0 : i32
    %c0_i32_0 = arith.constant 0 : i32
    %c0_i32_1 = arith.constant 0 : i32
    return %c0_i32, %c0_i32_0 : i32, i32
  }
  func.func @transform_8(%arg0: i32) -> (i32, i32) {
    %c0_i32 = arith.constant 0 : i32
    %c0_i32_0 = arith.constant 0 : i32
    %c0_i32_1 = arith.constant 0 : i32
    return %c0_i32, %c0_i32_0 : i32, i32
  }
  func.func @transform_9(%arg0: i32) -> (i32, i32) {
    %c0_i32 = arith.constant 0 : i32
    %c0_i32_0 = arith.constant 0 : i32
    %c0_i32_1 = arith.constant 0 : i32
    return %c0_i32, %c0_i32_0 : i32, i32
  }
  func.func @transform_10(%arg0: i32) -> (i32, i32) {
    %c0_i32 = arith.constant 0 : i32
    %c0_i32_0 = arith.constant 0 : i32
    %c0_i32_1 = arith.constant 0 : i32
    return %c0_i32, %c0_i32_0 : i32, i32
  }
  func.func @transform_11(%arg0: i32) -> (i32, i32) {
    %c0_i32 = arith.constant 0 : i32
    %c0_i32_0 = arith.constant 0 : i32
    %c0_i32_1 = arith.constant 0 : i32
    return %c0_i32, %c0_i32_0 : i32, i32
  }
  func.func @transform_12(%arg0: i32) -> (i32, i32, i32) {
    %c0_i32 = arith.constant 0 : i32
    %c0_i32_0 = arith.constant 0 : i32
    %c0_i32_1 = arith.constant 0 : i32
    return %arg0, %c0_i32, %c0_i32_0 : i32, i32, i32
  }
}

</mosaic_0001>

<llo_original>
// kernel: spatial_decom_forward.1
$region0: #{spatial_decom_forward.1}
  #allocation0 [shape = 'u32[]', space=smem, size = 0x4, offset = 0x4, fixed_abs, tag = 'smem constant byte address 0x4 - core index']
  #allocation1 [shape = 'u32[144,128]{1,0:T(1,128)}', space=vmem, size = 0x12000, scoped, tag = 'internal scratch']
  %s0 = inlined_call_operand.vmem [shape: f32[8,16,32], index: 0, kind: input, shape index: {}]
  %s1 = inlined_call_operand.vmem [shape: bf16[32,32], index: 1, kind: input, shape index: {}]
  %s2 = inlined_call_operand.vmem [shape: f32[1,32], index: 2, kind: input, shape index: {}]
  %s3 = inlined_call_operand.vmem [shape: f32[4,64,16], index: 3, kind: input, shape index: {}]
  %s4 = inlined_call_operand.vmem [shape: f32[4,16,32], index: 4, kind: input, shape index: {}]
  %s5 = inlined_call_operand.vmem [shape: bf16[32,256], index: 5, kind: input, shape index: {}]
  %s6 = inlined_call_operand.vmem [shape: bf16[32,256], index: 6, kind: input, shape index: {}]
  %s7 = inlined_call_operand.vmem [shape: f32[1,256], index: 7, kind: input, shape index: {}]
  %s8 = inlined_call_operand.vmem [shape: bf16[256,32], index: 8, kind: input, shape index: {}]
  %s9 = inlined_call_operand.vmem [shape: f32[1,32], index: 9, kind: input, shape index: {}]
  %s10 = inlined_call_operand.vmem [shape: f32[1,32], index: 10, kind: input, shape index: {}]
  %s11 = inlined_call_operand.vmem [shape: f32[1,32], index: 11, kind: input, shape index: {}]
  %s12 = inlined_call_operand.hbm [shape: f32[8,16,32], index: 12, kind: output, shape index: {}]
  %s13 = sld [smem:[#allocation0]]
  $region81: #{spatial_decom_forward.1} parent=0
    _
  %s15 = ssub.s32 1, %s13
  %s16 = scalar_select 0, %s15, %s13
  $region1: #{spatial_decom_forward.1} parent=0
    #allocation2 [shape = 'u8[65536]{0}', space=vmem, size = 0x10000, scoped, tag = 'output window, operand 0']
    #allocation3 [shape = 's32[2]{0}', space=sflag, size = 0x8, scoped, tag = 'scoped memory for spatial_decom_forward.1']
    %17 = vsyncpa [#allocation3], 0
    %s18 = scalar_lea.sflag [#allocation3], 1
    %19 = vsyncpa %s18, 0
    loop: start=0, step=1, limit=4
    $region2: #{spatial_decom_forward.1} parent=1 // loop_pre_header
      _
    $region3: #{spatial_decom_forward.1} parent=1 // loop_header
      %s21 = sphi 0, %s25
      %p22 = scmp.ge.s32.totalorder %s21, 4
      %s31 = sphi 0, %s33
      %s34 = sphi 0, %s31
      %s35 = sphi 0, %s34
      %s51 = sphi 0, %s35
      %s55 = sphi 0, %s55
      %s57 = sphi 0, %s55
      %s58 = sphi 0, %s57
      %s72 = sphi 0, %s58
      %s76 = sphi 0, %s76
      %s78 = sphi 0, %s76
      %s79 = sphi 0, %s78
      %s93 = sphi 0, %s79
      %s97 = sphi 0, %s97
      %s99 = sphi 0, %s97
      %s100 = sphi 0, %s99
      %s114 = sphi 0, %s100
      %s118 = sphi 0, %s118
      %s120 = sphi 0, %s118
      %s121 = sphi 0, %s120
      %s135 = sphi 0, %s121
      %s139 = sphi 0, %s139
      %s141 = sphi 0, %s139
      %s142 = sphi 0, %s141
      %s156 = sphi 0, %s142
      %s160 = sphi 0, %s160
      %s162 = sphi 0, %s160
      %s163 = sphi 0, %s162
      %s177 = sphi 0, %s163
      %s181 = sphi 0, %s181
      %s183 = sphi 0, %s181
      %s184 = sphi 0, %s183
      %s198 = sphi 0, %s184
      %s202 = sphi 0, %s202
      %s204 = sphi 0, %s202
      %s205 = sphi 0, %s204
      %s219 = sphi 0, %s205
      %s223 = sphi 0, %s223
      %s225 = sphi 0, %s223
      %s226 = sphi 0, %s225
      %s240 = sphi 0, %s226
      %s244 = sphi 0, %s244
      %s246 = sphi 0, %s244
      %s247 = sphi 0, %s246
      %s261 = sphi 0, %s247
      %s265 = sphi 0, %s265
      %s267 = sphi 0, %s265
      %s268 = sphi 0, %s267
      %s282 = sphi 0, %s268
      %s288 = sphi 0, %s290
      %s291 = sphi 0, %s288
      %s292 = sphi 0, %s291
      %s308 = sphi 0, %s292
    $region4: #{spatial_decom_forward.1} parent=1 // loop_header_branch
      %24 = sbr.rel (%p22) target = $region8
    $region5: #{spatial_decom_forward.1} parent=1 // loop_body
      %s26 = ssub.s32 %s21, 1
      %s27 = ssub.s32 %s21, 2
      %s28 = sadd.s32 %s21, 1
      %s29 = ssub.s32 %s21, %s28
      %p30 = scmp.eq.s32.totalorder %s29, 0
      %s32 = sadd.s32 %s31, 1
      %s33 = scalar_select %p30, %s31, %s32
      %p36 = pneg %p30
      %p37 = scmp.eq.s32.totalorder %s21, 1
      %p38 = por %p36, %p37
      %p39 = scmp.ne.s32.totalorder %s31, %s34
      %p40 = scmp.eq.s32.totalorder %s21, 0
      %p41 = por %p39, %p40
      %p42 = scmp.ne.s32.totalorder %s31, %s34
      %p43 = scmp.eq.s32.totalorder %s26, 1
      %p44 = por %p42, %p43
      %p45 = scmp.ne.s32.totalorder %s34, %s35
      %p46 = scmp.eq.s32.totalorder %s26, 0
      %p47 = por %p45, %p46
      %p48 = scmp.ne.s32.totalorder %s34, %s35
      %p49 = scmp.eq.s32.totalorder %s27, 1
      %p50 = por %p48, %p49
      %p52 = scmp.ne.s32.totalorder %s35, %s51
      %p53 = scmp.eq.s32.totalorder %s27, 0
      %p54 = por %p52, %p53
      %s56 = sadd.s32 %s55, 1
      %p59 = scmp.eq.s32.totalorder %s21, 1
      %p60 = scmp.ne.s32.totalorder %s55, %s57
      %p61 = scmp.eq.s32.totalorder %s21, 0
      %p62 = por %p60, %p61
      %p63 = scmp.ne.s32.totalorder %s55, %s57
      %p64 = scmp.eq.s32.totalorder %s26, 1
      %p65 = por %p63, %p64
      %p66 = scmp.ne.s32.totalorder %s57, %s58
      %p67 = scmp.eq.s32.totalorder %s26, 0
      %p68 = por %p66, %p67
      %p69 = scmp.ne.s32.totalorder %s57, %s58
      %p70 = scmp.eq.s32.totalorder %s27, 1
      %p71 = por %p69, %p70
      %p73 = scmp.ne.s32.totalorder %s58, %s72
      %p74 = scmp.eq.s32.totalorder %s27, 0
      %p75 = por %p73, %p74
      %s77 = sadd.s32 %s76, 1
      %p80 = scmp.eq.s32.totalorder %s21, 1
      %p81 = scmp.ne.s32.totalorder %s76, %s78
      %p82 = scmp.eq.s32.totalorder %s21, 0
      %p83 = por %p81, %p82
      %p84 = scmp.ne.s32.totalorder %s76, %s78
      %p85 = scmp.eq.s32.totalorder %s26, 1
      %p86 = por %p84, %p85
      %p87 = scmp.ne.s32.totalorder %s78, %s79
      %p88 = scmp.eq.s32.totalorder %s26, 0
      %p89 = por %p87, %p88
      %p90 = scmp.ne.s32.totalorder %s78, %s79
      %p91 = scmp.eq.s32.totalorder %s27, 1
      %p92 = por %p90, %p91
      %p94 = scmp.ne.s32.totalorder %s79, %s93
      %p95 = scmp.eq.s32.totalorder %s27, 0
      %p96 = por %p94, %p95
      %s98 = sadd.s32 %s97, 1
      %p101 = scmp.eq.s32.totalorder %s21, 1
      %p102 = scmp.ne.s32.totalorder %s97, %s99
      %p103 = scmp.eq.s32.totalorder %s21, 0
      %p104 = por %p102, %p103
      %p105 = scmp.ne.s32.totalorder %s97, %s99
      %p106 = scmp.eq.s32.totalorder %s26, 1
      %p107 = por %p105, %p106
      %p108 = scmp.ne.s32.totalorder %s99, %s100
      %p109 = scmp.eq.s32.totalorder %s26, 0
      %p110 = por %p108, %p109
      %p111 = scmp.ne.s32.totalorder %s99, %s100
      %p112 = scmp.eq.s32.totalorder %s27, 1
      %p113 = por %p111, %p112
      %p115 = scmp.ne.s32.totalorder %s100, %s114
      %p116 = scmp.eq.s32.totalorder %s27, 0
      %p117 = por %p115, %p116
      %s119 = sadd.s32 %s118, 1
      %p122 = scmp.eq.s32.totalorder %s21, 1
      %p123 = scmp.ne.s32.totalorder %s118, %s120
      %p124 = scmp.eq.s32.totalorder %s21, 0
      %p125 = por %p123, %p124
      %p126 = scmp.ne.s32.totalorder %s118, %s120
      %p127 = scmp.eq.s32.totalorder %s26, 1
      %p128 = por %p126, %p127
      %p129 = scmp.ne.s32.totalorder %s120, %s121
      %p130 = scmp.eq.s32.totalorder %s26, 0
      %p131 = por %p129, %p130
      %p132 = scmp.ne.s32.totalorder %s120, %s121
      %p133 = scmp.eq.s32.totalorder %s27, 1
      %p134 = por %p132, %p133
      %p136 = scmp.ne.s32.totalorder %s121, %s135
      %p137 = scmp.eq.s32.totalorder %s27, 0
      %p138 = por %p136, %p137
      %s140 = sadd.s32 %s139, 1
      %p143 = scmp.eq.s32.totalorder %s21, 1
      %p144 = scmp.ne.s32.totalorder %s139, %s141
      %p145 = scmp.eq.s32.totalorder %s21, 0
      %p146 = por %p144, %p145
      %p147 = scmp.ne.s32.totalorder %s139, %s141
      %p148 = scmp.eq.s32.totalorder %s26, 1
      %p149 = por %p147, %p148
      %p150 = scmp.ne.s32.totalorder %s141, %s142
      %p151 = scmp.eq.s32.totalorder %s26, 0
      %p152 = por %p150, %p151
      %p153 = scmp.ne.s32.totalorder %s141, %s142
      %p154 = scmp.eq.s32.totalorder %s27, 1
      %p155 = por %p153, %p154
      %p157 = scmp.ne.s32.totalorder %s142, %s156
      %p158 = scmp.eq.s32.totalorder %s27, 0
      %p159 = por %p157, %p158
      %s161 = sadd.s32 %s160, 1
      %p164 = scmp.eq.s32.totalorder %s21, 1
      %p165 = scmp.ne.s32.totalorder %s160, %s162
      %p166 = scmp.eq.s32.totalorder %s21, 0
      %p167 = por %p165, %p166
      %p168 = scmp.ne.s32.totalorder %s160, %s162
      %p169 = scmp.eq.s32.totalorder %s26, 1
      %p170 = por %p168, %p169
      %p171 = scmp.ne.s32.totalorder %s162, %s163
      %p172 = scmp.eq.s32.totalorder %s26, 0
      %p173 = por %p171, %p172
      %p174 = scmp.ne.s32.totalorder %s162, %s163
      %p175 = scmp.eq.s32.totalorder %s27, 1
      %p176 = por %p174, %p175
      %p178 = scmp.ne.s32.totalorder %s163, %s177
      %p179 = scmp.eq.s32.totalorder %s27, 0
      %p180 = por %p178, %p179
      %s182 = sadd.s32 %s181, 1
      %p185 = scmp.eq.s32.totalorder %s21, 1
      %p186 = scmp.ne.s32.totalorder %s181, %s183
      %p187 = scmp.eq.s32.totalorder %s21, 0
      %p188 = por %p186, %p187
      %p189 = scmp.ne.s32.totalorder %s181, %s183
      %p190 = scmp.eq.s32.totalorder %s26, 1
      %p191 = por %p189, %p190
      %p192 = scmp.ne.s32.totalorder %s183, %s184
      %p193 = scmp.eq.s32.totalorder %s26, 0
      %p194 = por %p192, %p193
      %p195 = scmp.ne.s32.totalorder %s183, %s184
      %p196 = scmp.eq.s32.totalorder %s27, 1
      %p197 = por %p195, %p196
      %p199 = scmp.ne.s32.totalorder %s184, %s198
      %p200 = scmp.eq.s32.totalorder %s27, 0
      %p201 = por %p199, %p200
      %s203 = sadd.s32 %s202, 1
      %p206 = scmp.eq.s32.totalorder %s21, 1
      %p207 = scmp.ne.s32.totalorder %s202, %s204
      %p208 = scmp.eq.s32.totalorder %s21, 0
      %p209 = por %p207, %p208
      %p210 = scmp.ne.s32.totalorder %s202, %s204
      %p211 = scmp.eq.s32.totalorder %s26, 1
      %p212 = por %p210, %p211
      %p213 = scmp.ne.s32.totalorder %s204, %s205
      %p214 = scmp.eq.s32.totalorder %s26, 0
      %p215 = por %p213, %p214
      %p216 = scmp.ne.s32.totalorder %s204, %s205
      %p217 = scmp.eq.s32.totalorder %s27, 1
      %p218 = por %p216, %p217
      %p220 = scmp.ne.s32.totalorder %s205, %s219
      %p221 = scmp.eq.s32.totalorder %s27, 0
      %p222 = por %p220, %p221
      %s224 = sadd.s32 %s223, 1
      %p227 = scmp.eq.s32.totalorder %s21, 1
      %p228 = scmp.ne.s32.totalorder %s223, %s225
      %p229 = scmp.eq.s32.totalorder %s21, 0
      %p230 = por %p228, %p229
      %p231 = scmp.ne.s32.totalorder %s223, %s225
      %p232 = scmp.eq.s32.totalorder %s26, 1
      %p233 = por %p231, %p232
      %p234 = scmp.ne.s32.totalorder %s225, %s226
      %p235 = scmp.eq.s32.totalorder %s26, 0
      %p236 = por %p234, %p235
      %p237 = scmp.ne.s32.totalorder %s225, %s226
      %p238 = scmp.eq.s32.totalorder %s27, 1
      %p239 = por %p237, %p238
      %p241 = scmp.ne.s32.totalorder %s226, %s240
      %p242 = scmp.eq.s32.totalorder %s27, 0
      %p243 = por %p241, %p242
      %s245 = sadd.s32 %s244, 1
      %p248 = scmp.eq.s32.totalorder %s21, 1
      %p249 = scmp.ne.s32.totalorder %s244, %s246
      %p250 = scmp.eq.s32.totalorder %s21, 0
      %p251 = por %p249, %p250
      %p252 = scmp.ne.s32.totalorder %s244, %s246
      %p253 = scmp.eq.s32.totalorder %s26, 1
      %p254 = por %p252, %p253
      %p255 = scmp.ne.s32.totalorder %s246, %s247
      %p256 = scmp.eq.s32.totalorder %s26, 0
      %p257 = por %p255, %p256
      %p258 = scmp.ne.s32.totalorder %s246, %s247
      %p259 = scmp.eq.s32.totalorder %s27, 1
      %p260 = por %p258, %p259
      %p262 = scmp.ne.s32.totalorder %s247, %s261
      %p263 = scmp.eq.s32.totalorder %s27, 0
      %p264 = por %p262, %p263
      %s266 = sadd.s32 %s265, 1
      %p269 = scmp.eq.s32.totalorder %s21, 1
      %p270 = scmp.ne.s32.totalorder %s265, %s267
      %p271 = scmp.eq.s32.totalorder %s21, 0
      %p272 = por %p270, %p271
      %p273 = scmp.ne.s32.totalorder %s265, %s267
      %p274 = scmp.eq.s32.totalorder %s26, 1
      %p275 = por %p273, %p274
      %p276 = scmp.ne.s32.totalorder %s267, %s268
      %p277 = scmp.eq.s32.totalorder %s26, 0
      %p278 = por %p276, %p277
      %p279 = scmp.ne.s32.totalorder %s267, %s268
      %p280 = scmp.eq.s32.totalorder %s27, 1
      %p281 = por %p279, %p280
      %p283 = scmp.ne.s32.totalorder %s268, %s282
      %p284 = scmp.eq.s32.totalorder %s27, 0
      %p285 = por %p283, %p284
      %s286 = ssub.s32 %s21, %s28
      %p287 = scmp.eq.s32.totalorder %s286, 0
      %s289 = sadd.s32 %s288, 1
      %s290 = scalar_select %p287, %s288, %s289
      %p293 = pneg %p287
      %p294 = scmp.eq.s32.totalorder %s21, 1
      %p295 = por %p293, %p294
      %p296 = scmp.ne.s32.totalorder %s288, %s291
      %p297 = scmp.eq.s32.totalorder %s21, 0
      %p298 = por %p296, %p297
      %p299 = scmp.ne.s32.totalorder %s288, %s291
      %p300 = scmp.eq.s32.totalorder %s26, 1
      %p301 = por %p299, %p300
      %p302 = scmp.ne.s32.totalorder %s291, %s292
      %p303 = scmp.eq.s32.totalorder %s26, 0
      %p304 = por %p302, %p303
      %p305 = scmp.ne.s32.totalorder %s291, %s292
      %p306 = scmp.eq.s32.totalorder %s27, 1
      %p307 = por %p305, %p306
      %p309 = scmp.ne.s32.totalorder %s292, %s308
      %p310 = scmp.eq.s32.totalorder %s27, 0
      %p311 = por %p309, %p310
      %p312 = scmp.le.s32.totalorder 1, %s21
      %p313 = scmp.lt.s32.totalorder %s21, 3
      %p314 = pnand %p312, %p313
      %p315 = pneg %p314
      // Predicated region
      $region9: #{spatial_decom_forward.1} parent=5 // pred_check
        _
      $region10: #{spatial_decom_forward.1} parent=5 // pred_check_branch
        %317 = sbr.rel (%p314) target = $region12
      $region11: #{spatial_decom_forward.1} parent=5 // pred_region
        %s318 = ssub.s32 %s21, 1
        // Predicated region
        $region13: #{spatial_decom_forward.1} parent=11 // pred_check
          %p319 = pneg %p68
        $region14: #{spatial_decom_forward.1} parent=11 // pred_check_branch
          %321 = sbr.rel (%p319) target = $region16
        $region15: #{spatial_decom_forward.1} parent=11 // pred_region
          _
        $region16: #{spatial_decom_forward.1} parent=11 // pred_fallthru
          _
        // Predicated region
        $region17: #{spatial_decom_forward.1} parent=11 // pred_check
          %p322 = pneg %p89
        $region18: #{spatial_decom_forward.1} parent=11 // pred_check_branch
          %324 = sbr.rel (%p322) target = $region20
        $region19: #{spatial_decom_forward.1} parent=11 // pred_region
          _
        $region20: #{spatial_decom_forward.1} parent=11 // pred_fallthru
          _
        // Predicated region
        $region21: #{spatial_decom_forward.1} parent=11 // pred_check
          %p325 = pneg %p110
        $region22: #{spatial_decom_forward.1} parent=11 // pred_check_branch
          %327 = sbr.rel (%p325) target = $region24
        $region23: #{spatial_decom_forward.1} parent=11 // pred_region
          _
        $region24: #{spatial_decom_forward.1} parent=11 // pred_fallthru
          _
        // Predicated region
        $region25: #{spatial_decom_forward.1} parent=11 // pred_check
          %p328 = pneg %p131
        $region26: #{spatial_decom_forward.1} parent=11 // pred_check_branch
          %330 = sbr.rel (%p328) target = $region28
        $region27: #{spatial_decom_forward.1} parent=11 // pred_region
          _
        $region28: #{spatial_decom_forward.1} parent=11 // pred_fallthru
          _
        // Predicated region
        $region29: #{spatial_decom_forward.1} parent=11 // pred_check
          %p331 = pneg %p152
        $region30: #{spatial_decom_forward.1} parent=11 // pred_check_branch
          %333 = sbr.rel (%p331) target = $region32
        $region31: #{spatial_decom_forward.1} parent=11 // pred_region
          _
        $region32: #{spatial_decom_forward.1} parent=11 // pred_fallthru
          _
        // Predicated region
        $region33: #{spatial_decom_forward.1} parent=11 // pred_check
          %p334 = pneg %p173
        $region34: #{spatial_decom_forward.1} parent=11 // pred_check_branch
          %336 = sbr.rel (%p334) target = $region36
        $region35: #{spatial_decom_forward.1} parent=11 // pred_region
          _
        $region36: #{spatial_decom_forward.1} parent=11 // pred_fallthru
          _
        // Predicated region
        $region37: #{spatial_decom_forward.1} parent=11 // pred_check
          %p337 = pneg %p194
        $region38: #{spatial_decom_forward.1} parent=11 // pred_check_branch
          %339 = sbr.rel (%p337) target = $region40
        $region39: #{spatial_decom_forward.1} parent=11 // pred_region
          _
        $region40: #{spatial_decom_forward.1} parent=11 // pred_fallthru
          _
        // Predicated region
        $region41: #{spatial_decom_forward.1} parent=11 // pred_check
          %p340 = pneg %p215
        $region42: #{spatial_decom_forward.1} parent=11 // pred_check_branch
          %342 = sbr.rel (%p340) target = $region44
        $region43: #{spatial_decom_forward.1} parent=11 // pred_region
          _
        $region44: #{spatial_decom_forward.1} parent=11 // pred_fallthru
          _
        // Predicated region
        $region45: #{spatial_decom_forward.1} parent=11 // pred_check
          %p343 = pneg %p236
        $region46: #{spatial_decom_forward.1} parent=11 // pred_check_branch
          %345 = sbr.rel (%p343) target = $region48
        $region47: #{spatial_decom_forward.1} parent=11 // pred_region
          _
        $region48: #{spatial_decom_forward.1} parent=11 // pred_fallthru
          _
        // Predicated region
        $region49: #{spatial_decom_forward.1} parent=11 // pred_check
          %p346 = pneg %p257
        $region50: #{spatial_decom_forward.1} parent=11 // pred_check_branch
          %348 = sbr.rel (%p346) target = $region52
        $region51: #{spatial_decom_forward.1} parent=11 // pred_region
          _
        $region52: #{spatial_decom_forward.1} parent=11 // pred_fallthru
          _
        // Predicated region
        $region53: #{spatial_decom_forward.1} parent=11 // pred_check
          %p349 = pneg %p278
        $region54: #{spatial_decom_forward.1} parent=11 // pred_check_branch
          %351 = sbr.rel (%p349) target = $region56
        $region55: #{spatial_decom_forward.1} parent=11 // pred_region
          _
        $region56: #{spatial_decom_forward.1} parent=11 // pred_fallthru
          _
      $region12: #{spatial_decom_forward.1} parent=5 // pred_fallthru
        _
      %p352 = scmp.lt.s32.totalorder %s21, 2
      // Predicated region
      $region57: #{spatial_decom_forward.1} parent=5 // pred_check
        %p353 = pneg %p352
      $region58: #{spatial_decom_forward.1} parent=5 // pred_check_branch
        %355 = sbr.rel (%p353) target = $region60
      $region59: #{spatial_decom_forward.1} parent=5 // pred_region
        // Predicated region
        $region61: #{spatial_decom_forward.1} parent=59 // pred_check
          %p356 = pneg %p41
        $region62: #{spatial_decom_forward.1} parent=59 // pred_check_branch
          %358 = sbr.rel (%p356) target = $region64
        $region63: #{spatial_decom_forward.1} parent=59 // pred_region
          %s359 = smul.u32 4, %s21
          %p360 = scmp.lt.s32.totalorder %s359, 7
          %s361 = scalar_select %p360, %s359, 7
          %s362 = smul.addr %s361, 2
          %s363 = smul.addr %s362, 8
          %s364 = scalar_lea.vmem %s0, %s363
          %s365 = smul.u32 4, %s21
        $region64: #{spatial_decom_forward.1} parent=59 // pred_fallthru
          _
      $region60: #{spatial_decom_forward.1} parent=5 // pred_fallthru
        _
      %p366 = scmp.le.s32.totalorder 1, %s21
      %p367 = scmp.lt.s32.totalorder %s21, 3
      %p368 = pnand %p366, %p367
      %p369 = pneg %p368
      // Predicated region
      $region65: #{spatial_decom_forward.1} parent=5 // pred_check
        _
      $region66: #{spatial_decom_forward.1} parent=5 // pred_check_branch
        %371 = sbr.rel (%p368) target = $region68
      $region67: #{spatial_decom_forward.1} parent=5 // pred_region
        %s372 = ssub.s32 %s21, 1
        %s373 = smul.u32 4, %s26
        %p374 = scmp.lt.s32.totalorder %s373, 7
        %s375 = scalar_select %p374, %s373, 7
        %s376 = smul.addr %s375, 2
        %s377 = smul.addr %s376, 8
        %s378 = scalar_lea.vmem %s0, %s377
        %p379 = pneg %p47
        %p380 = pneg %p44
        %p381 = pneg %p68
        %p382 = pneg %p65
        %p383 = pneg %p89
        %p384 = pneg %p86
        %p385 = pneg %p110
        %p386 = pneg %p107
        %p387 = pneg %p131
        %p388 = pneg %p128
        %p389 = pneg %p152
        %p390 = pneg %p149
        %p391 = pneg %p173
        %p392 = pneg %p170
        %p393 = pneg %p194
        %p394 = pneg %p191
        %p395 = pneg %p215
        %p396 = pneg %p212
        %p397 = pneg %p236
        %p398 = pneg %p233
        %p399 = pneg %p257
        %p400 = pneg %p254
        %p401 = pneg %p278
        %p402 = pneg %p275
        %p403 = pneg %p304
        %p404 = pneg %p301
        %s405 = sand.u32 %s291, 1
        %s406 = scalar_lea.sflag [#allocation3], %s405
        %s407 = sand.u32 %s291, 1
        %s408 = smul.addr %s407, 64
        %s409 = scalar_lea.vmem [#allocation2], %s408
        %s410 = smul.u32 4, %s26
        %p411 = scmp.lt.s32.totalorder %s410, 7
        %s412 = scalar_select %p411, %s410, 7
        %s413 = smul.addr %s412, 2
        %s414 = smul.addr %s413, 8
        %s415 = scalar_lea.vmem %s0, %s414
        %s416 = smul.u32 4, %s26
        %s417 = smul.u32 4, %s26
        %v419 = vld [vmem:[%s415] sm:$0xff]
        %v420 = vld [vmem:[%s415 + $0x8] sm:$0xff]
        %v421 = vld [vmem:[%s415 + $0x10] sm:$0xff]
        %v422 = vld [vmem:[%s415 + $0x18] sm:$0xff]
        %v423 = vld [vmem:[%s415 + $0x20] sm:$0xff]
        %v424 = vld [vmem:[%s415 + $0x28] sm:$0xff]
        %v425 = vld [vmem:[%s415 + $0x30] sm:$0xff]
        %v426 = vld [vmem:[%s415 + $0x38] sm:$0xff]
        %v427 = vpack.c.bf16 %v420, %v419
        %v428 = vpack.c.bf16 %v422, %v421
        %v429 = vpack.c.bf16 %v424, %v423
        %v430 = vpack.c.bf16 %v426, %v425
        %v431 = vld [vmem:[%s1] sm:$0xf]
        %v432 = vld [vmem:[%s1 + $0x4] sm:$0xf]
        %v433 = vld [vmem:[%s1 + $0x8] sm:$0xf]
        %v434 = vld [vmem:[%s1 + $0xc] sm:$0xf]
        %v435 = vld [vmem:[%s2] sm:$0x1]
        %v437 = vlaneseq
        %v438 = vshrl.u32 %v437, 7
        %v439 = vsub.s32 0, %v438
        %v440 = vrot.slane %v435, %v439
        %v446 = vunpack.c.l.b16 %v431
        %v447 = vunpack.c.l.b16 %v432
        %v448 = vunpack.c.l.b16 %v433
        %v449 = vunpack.c.l.b16 %v434
        %v450 = vpack.c.b16 %v447, %v446
        %v451 = vpack.c.b16 %v449, %v448
        %vm454 = vcmask 261120
        %v456 = vsel %vm454, %v427, 0
        %v459 = vsel %vm454, %v428, 0
        %v462 = vsel %vm454, %v429, 0
        %v465 = vsel %vm454, %v430, 0
        %467 = vmatprep.subr.bf16.mxu0 0
        %468 = vmatpush1.bf16.msra.mxu0 0
        %469 = vmatprep.subr.bf16.mxu0 0
        %470 = vmatpush1.bf16.msra.mxu0 0
        %471 = vmatprep.subr.bf16.mxu0 0
        %472 = vmatpush1.bf16.msra.mxu0 0
        %473 = vmatprep.subr.bf16.mxu0 0
        %474 = vmatpush1.bf16.msra.mxu0 0
        %475 = vmatprep.subr.bf16.mxu0 0
        %476 = vmatpush1.bf16.msra.mxu0 0
        %477 = vmatprep.subr.bf16.mxu0 0
        %478 = vmatpush1.bf16.msra.mxu0 0
        %479 = vmatprep.subr.bf16.mxu0 0
        %480 = vmatpush1.bf16.msra.mxu0 %v451
        %481 = vmatprep.subr.bf16.mxu0 0
        %482 = vmatpush1.bf16.msra.mxu0 %v450
        %483 = vmatprep.subr.bf16.mxu0 0
        %484 = vmatpush2.bf16.msra.mxu0 0
        %485 = vmatprep.subr.bf16.mxu0 0
        %486 = vmatpush2.bf16.msra.mxu0 0
        %487 = vmatprep.subr.bf16.mxu0 0
        %488 = vmatpush2.bf16.msra.mxu0 0
        %489 = vmatprep.subr.bf16.mxu0 0
        %490 = vmatpush2.bf16.msra.mxu0 0
        %491 = vmatprep.subr.bf16.mxu0 0
        %492 = vmatpush2.bf16.msra.mxu0 0
        %493 = vmatprep.subr.bf16.mxu0 0
        %494 = vmatpush2.bf16.msra.mxu0 0
        %495 = vmatprep.subr.bf16.mxu0 0
        %496 = vmatpush2.bf16.msra.mxu0 0
        %497 = vmatprep.subr.bf16.mxu0 0
        %498 = vmatpush2.bf16.msra.mxu0 0
        %499 = vmatprep.mubr.bf16.mxu0 0
        %500 = vmatmul.mubr.bf16.gmra.mxu0 %v456
        %v501 = vpop.f32.mrf.mxu0
        %v502 = vadd.f32 %v440, %v501
        %v503 = vpop.f32.mrf.mxu0
        %v504 = vpop.f32.mrf.mxu0
        %v505 = vadd.f32 %v440, %v504
        %v506 = vpop.f32.mrf.mxu0
        %507 = vmatprep.mubr.bf16.mxu0 0
        %508 = vmatmul.mubr.bf16.gmra.mxu0 %v459
        %v509 = vpop.f32.mrf.mxu0
        %v510 = vadd.f32 %v440, %v509
        %v511 = vpop.f32.mrf.mxu0
        %v512 = vpop.f32.mrf.mxu0
        %v513 = vadd.f32 %v440, %v512
        %v514 = vpop.f32.mrf.mxu0
        %515 = vmatprep.mubr.bf16.mxu0 0
        %516 = vmatmul.mubr.bf16.gmra.mxu0 %v462
        %v517 = vpop.f32.mrf.mxu0
        %v518 = vadd.f32 %v440, %v517
        %v519 = vpop.f32.mrf.mxu0
        %v520 = vpop.f32.mrf.mxu0
        %v521 = vadd.f32 %v440, %v520
        %v522 = vpop.f32.mrf.mxu0
        %523 = vmatprep.mubr.bf16.mxu0 0
        %524 = vmatmul.mubr.bf16.gmra.mxu0 %v465
        %v525 = vpop.f32.mrf.mxu0
        %v526 = vadd.f32 %v440, %v525
        %v527 = vpop.f32.mrf.mxu0
        %v528 = vpop.f32.mrf.mxu0
        %v529 = vadd.f32 %v440, %v528
        %v530 = vpop.f32.mrf.mxu0
        %531 = vdwg.mxu0
        %v532 = vld [vmem:[%s3] sm:$0xff]
        %v533 = vld [vmem:[%s3 + $0x8] sm:$0xff]
        %v534 = vld [vmem:[%s3 + $0x10] sm:$0xff]
        %v535 = vld [vmem:[%s3 + $0x18] sm:$0xff]
        %v536 = vld [vmem:[%s3 + $0x20] sm:$0xff]
        %v537 = vld [vmem:[%s3 + $0x28] sm:$0xff]
        %v538 = vld [vmem:[%s3 + $0x30] sm:$0xff]
        %v539 = vld [vmem:[%s3 + $0x38] sm:$0xff]
        %v540 = vld [vmem:[%s3 + $0x40] sm:$0xff]
        %v541 = vld [vmem:[%s3 + $0x48] sm:$0xff]
        %v542 = vld [vmem:[%s3 + $0x50] sm:$0xff]
        %v543 = vld [vmem:[%s3 + $0x58] sm:$0xff]
        %v544 = vld [vmem:[%s3 + $0x60] sm:$0xff]
        %v545 = vld [vmem:[%s3 + $0x68] sm:$0xff]
        %v546 = vld [vmem:[%s3 + $0x70] sm:$0xff]
        %v547 = vld [vmem:[%s3 + $0x78] sm:$0xff]
        %v548 = vld [vmem:[%s3 + $0x80] sm:$0xff]
        %v549 = vld [vmem:[%s3 + $0x88] sm:$0xff]
        %v550 = vld [vmem:[%s3 + $0x90] sm:$0xff]
        %v551 = vld [vmem:[%s3 + $0x98] sm:$0xff]
        %v552 = vld [vmem:[%s3 + $0xa0] sm:$0xff]
        %v553 = vld [vmem:[%s3 + $0xa8] sm:$0xff]
        %v554 = vld [vmem:[%s3 + $0xb0] sm:$0xff]
        %v555 = vld [vmem:[%s3 + $0xb8] sm:$0xff]
        %v556 = vld [vmem:[%s3 + $0xc0] sm:$0xff]
        %v557 = vld [vmem:[%s3 + $0xc8] sm:$0xff]
        %v558 = vld [vmem:[%s3 + $0xd0] sm:$0xff]
        %v559 = vld [vmem:[%s3 + $0xd8] sm:$0xff]
        %v560 = vld [vmem:[%s3 + $0xe0] sm:$0xff]
        %v561 = vld [vmem:[%s3 + $0xe8] sm:$0xff]
        %v562 = vld [vmem:[%s3 + $0xf0] sm:$0xff]
        %v563 = vld [vmem:[%s3 + $0xf8] sm:$0xff]
        %vm564 = vcmask 130048
        %v566 = vsel %vm564, %v532, 0
        %v569 = vsel %vm564, %v533, 0
        %v572 = vsel %vm564, %v534, 0
        %v575 = vsel %vm564, %v535, 0
        %v578 = vsel %vm564, %v536, 0
        %v581 = vsel %vm564, %v537, 0
        %v584 = vsel %vm564, %v538, 0
        %v587 = vsel %vm564, %v539, 0
        %589 = vmatprep.subr.mxu0 0.0
        %590 = vmatpush1.msra.mxu0 0.0
        %591 = vmatprep.subr.mxu0 0.0
        %592 = vmatpush1.msra.mxu0 0.0
        %593 = vmatprep.subr.mxu0 0.0
        %594 = vmatpush1.msra.mxu0 0.0
        %595 = vmatprep.subr.mxu0 0.0
        %596 = vmatpush1.msra.mxu0 0.0
        %597 = vmatprep.subr.mxu0 0.0
        %598 = vmatpush1.msra.mxu0 0.0
        %599 = vmatprep.subr.mxu0 0.0
        %600 = vmatpush1.msra.mxu0 0.0
        %601 = vmatprep.subr.mxu0 0.0
        %602 = vmatpush1.msra.mxu0 0.0
        %603 = vmatprep.subr.mxu0 0.0
        %604 = vmatpush1.msra.mxu0 0.0
        %605 = vmatprep.subr.mxu0 0.0
        %606 = vmatpush1.msra.mxu0 0.0
        %607 = vmatprep.subr.mxu0 0.0
        %608 = vmatpush1.msra.mxu0 0.0
        %609 = vmatprep.subr.mxu0 0.0
        %610 = vmatpush1.msra.mxu0 0.0
        %611 = vmatprep.subr.mxu0 0.0
        %612 = vmatpush1.msra.mxu0 0.0
        %613 = vmatprep.subr.mxu0 0.0
        %614 = vmatpush1.msra.mxu0 0.0
        %615 = vmatprep.subr.mxu0 0.0
        %616 = vmatpush1.msra.mxu0 0.0
        %617 = vmatprep.subr.mxu0 0.0
        %618 = vmatpush1.msra.mxu0 %v505
        %619 = vmatprep.subr.mxu0 0.0
        %620 = vmatpush1.msra.mxu0 %v502
        %621 = vmatprep.subr.mxu0 0.0
        %622 = vmatpush2.msra.mxu0 0.0
        %623 = vmatprep.subr.mxu0 0.0
        %624 = vmatpush2.msra.mxu0 0.0
        %625 = vmatprep.subr.mxu0 0.0
        %626 = vmatpush2.msra.mxu0 0.0
        %627 = vmatprep.subr.mxu0 0.0
        %628 = vmatpush2.msra.mxu0 0.0
        %629 = vmatprep.subr.mxu0 0.0
        %630 = vmatpush2.msra.mxu0 0.0
        %631 = vmatprep.subr.mxu0 0.0
        %632 = vmatpush2.msra.mxu0 0.0
        %633 = vmatprep.subr.mxu0 0.0
        %634 = vmatpush2.msra.mxu0 0.0
        %635 = vmatprep.subr.mxu0 0.0
        %636 = vmatpush2.msra.mxu0 0.0
        %637 = vmatprep.subr.mxu0 0.0
        %638 = vmatpush2.msra.mxu0 0.0
        %639 = vmatprep.subr.mxu0 0.0
        %640 = vmatpush2.msra.mxu0 0.0
        %641 = vmatprep.subr.mxu0 0.0
        %642 = vmatpush2.msra.mxu0 0.0
        %643 = vmatprep.subr.mxu0 0.0
        %644 = vmatpush2.msra.mxu0 0.0
        %645 = vmatprep.subr.mxu0 0.0
        %646 = vmatpush2.msra.mxu0 0.0
        %647 = vmatprep.subr.mxu0 0.0
        %648 = vmatpush2.msra.mxu0 0.0
        %649 = vmatprep.subr.mxu0 0.0
        %650 = vmatpush2.msra.mxu0 0.0
        %651 = vmatprep.subr.mxu0 0.0
        %652 = vmatpush2.msra.mxu0 0.0
        %653 = vmatprep.mubr.f32.mxu0 0.0
        %654 = vmatmul.mubr.f32.gmra.mxu0 %v566
        %v655 = vpop.f32.mrf.mxu0
        %v656 = vadd.f32 0.0, %v655
        %v657 = vpop.f32.mrf.mxu0
        %658 = vmatprep.mubr.f32.mxu0 0.0
        %659 = vmatmul.mubr.f32.gmra.mxu0 %v569
        %v660 = vpop.f32.mrf.mxu0
        %v661 = vadd.f32 0.0, %v660
        %v662 = vpop.f32.mrf.mxu0
        %663 = vmatprep.mubr.f32.mxu0 0.0
        %664 = vmatmul.mubr.f32.gmra.mxu0 %v572
        %v665 = vpop.f32.mrf.mxu0
        %v666 = vadd.f32 0.0, %v665
        %v667 = vpop.f32.mrf.mxu0
        %668 = vmatprep.mubr.f32.mxu0 0.0
        %669 = vmatmul.mubr.f32.gmra.mxu0 %v575
        %v670 = vpop.f32.mrf.mxu0
        %v671 = vadd.f32 0.0, %v670
        %v672 = vpop.f32.mrf.mxu0
        %673 = vmatprep.mubr.f32.mxu0 0.0
        %674 = vmatmul.mubr.f32.gmra.mxu0 %v578
        %v675 = vpop.f32.mrf.mxu0
        %v676 = vadd.f32 0.0, %v675
        %v677 = vpop.f32.mrf.mxu0
        %678 = vmatprep.mubr.f32.mxu0 0.0
        %679 = vmatmul.mubr.f32.gmra.mxu0 %v581
        %v680 = vpop.f32.mrf.mxu0
        %v681 = vadd.f32 0.0, %v680
        %v682 = vpop.f32.mrf.mxu0
        %683 = vmatprep.mubr.f32.mxu0 0.0
        %684 = vmatmul.mubr.f32.gmra.mxu0 %v584
        %v685 = vpop.f32.mrf.mxu0
        %v686 = vadd.f32 0.0, %v685
        %v687 = vpop.f32.mrf.mxu0
        %688 = vmatprep.mubr.f32.mxu0 0.0
        %689 = vmatmul.mubr.f32.gmra.mxu0 %v587
        %v690 = vpop.f32.mrf.mxu0
        %v691 = vadd.f32 0.0, %v690
        %v692 = vpop.f32.mrf.mxu0
        %693 = vdwg.mxu0
        %v695 = vsel %vm564, %v540, 0
        %v698 = vsel %vm564, %v541, 0
        %v701 = vsel %vm564, %v542, 0
        %v704 = vsel %vm564, %v543, 0
        %v707 = vsel %vm564, %v544, 0
        %v710 = vsel %vm564, %v545, 0
        %v713 = vsel %vm564, %v546, 0
        %v716 = vsel %vm564, %v547, 0
        %718 = vmatprep.subr.mxu0 0.0
        %719 = vmatpush1.msra.mxu0 0.0
        %720 = vmatprep.subr.mxu0 0.0
        %721 = vmatpush1.msra.mxu0 0.0
        %722 = vmatprep.subr.mxu0 0.0
        %723 = vmatpush1.msra.mxu0 0.0
        %724 = vmatprep.subr.mxu0 0.0
        %725 = vmatpush1.msra.mxu0 0.0
        %726 = vmatprep.subr.mxu0 0.0
        %727 = vmatpush1.msra.mxu0 0.0
        %728 = vmatprep.subr.mxu0 0.0
        %729 = vmatpush1.msra.mxu0 0.0
        %730 = vmatprep.subr.mxu0 0.0
        %731 = vmatpush1.msra.mxu0 0.0
        %732 = vmatprep.subr.mxu0 0.0
        %733 = vmatpush1.msra.mxu0 0.0
        %734 = vmatprep.subr.mxu0 0.0
        %735 = vmatpush1.msra.mxu0 0.0
        %736 = vmatprep.subr.mxu0 0.0
        %737 = vmatpush1.msra.mxu0 0.0
        %738 = vmatprep.subr.mxu0 0.0
        %739 = vmatpush1.msra.mxu0 0.0
        %740 = vmatprep.subr.mxu0 0.0
        %741 = vmatpush1.msra.mxu0 0.0
        %742 = vmatprep.subr.mxu0 0.0
        %743 = vmatpush1.msra.mxu0 0.0
        %744 = vmatprep.subr.mxu0 0.0
        %745 = vmatpush1.msra.mxu0 0.0
        %746 = vmatprep.subr.mxu0 0.0
        %747 = vmatpush1.msra.mxu0 %v513
        %748 = vmatprep.subr.mxu0 0.0
        %749 = vmatpush1.msra.mxu0 %v510
        %750 = vmatprep.subr.mxu0 0.0
        %751 = vmatpush2.msra.mxu0 0.0
        %752 = vmatprep.subr.mxu0 0.0
        %753 = vmatpush2.msra.mxu0 0.0
        %754 = vmatprep.subr.mxu0 0.0
        %755 = vmatpush2.msra.mxu0 0.0
        %756 = vmatprep.subr.mxu0 0.0
        %757 = vmatpush2.msra.mxu0 0.0
        %758 = vmatprep.subr.mxu0 0.0
        %759 = vmatpush2.msra.mxu0 0.0
        %760 = vmatprep.subr.mxu0 0.0
        %761 = vmatpush2.msra.mxu0 0.0
        %762 = vmatprep.subr.mxu0 0.0
        %763 = vmatpush2.msra.mxu0 0.0
        %764 = vmatprep.subr.mxu0 0.0
        %765 = vmatpush2.msra.mxu0 0.0
        %766 = vmatprep.subr.mxu0 0.0
        %767 = vmatpush2.msra.mxu0 0.0
        %768 = vmatprep.subr.mxu0 0.0
        %769 = vmatpush2.msra.mxu0 0.0
        %770 = vmatprep.subr.mxu0 0.0
        %771 = vmatpush2.msra.mxu0 0.0
        %772 = vmatprep.subr.mxu0 0.0
        %773 = vmatpush2.msra.mxu0 0.0
        %774 = vmatprep.subr.mxu0 0.0
        %775 = vmatpush2.msra.mxu0 0.0
        %776 = vmatprep.subr.mxu0 0.0
        %777 = vmatpush2.msra.mxu0 0.0
        %778 = vmatprep.subr.mxu0 0.0
        %779 = vmatpush2.msra.mxu0 0.0
        %780 = vmatprep.subr.mxu0 0.0
        %781 = vmatpush2.msra.mxu0 0.0
        %782 = vmatprep.mubr.f32.mxu0 0.0
        %783 = vmatmul.mubr.f32.gmra.mxu0 %v695
        %v784 = vpop.f32.mrf.mxu0
        %v785 = vadd.f32 0.0, %v784
        %v786 = vpop.f32.mrf.mxu0
        %787 = vmatprep.mubr.f32.mxu0 0.0
        %788 = vmatmul.mubr.f32.gmra.mxu0 %v698
        %v789 = vpop.f32.mrf.mxu0
        %v790 = vadd.f32 0.0, %v789
        %v791 = vpop.f32.mrf.mxu0
        %792 = vmatprep.mubr.f32.mxu0 0.0
        %793 = vmatmul.mubr.f32.gmra.mxu0 %v701
        %v794 = vpop.f32.mrf.mxu0
        %v795 = vadd.f32 0.0, %v794
        %v796 = vpop.f32.mrf.mxu0
        %797 = vmatprep.mubr.f32.mxu0 0.0
        %798 = vmatmul.mubr.f32.gmra.mxu0 %v704
        %v799 = vpop.f32.mrf.mxu0
        %v800 = vadd.f32 0.0, %v799
        %v801 = vpop.f32.mrf.mxu0
        %802 = vmatprep.mubr.f32.mxu0 0.0
        %803 = vmatmul.mubr.f32.gmra.mxu0 %v707
        %v804 = vpop.f32.mrf.mxu0
        %v805 = vadd.f32 0.0, %v804
        %v806 = vpop.f32.mrf.mxu0
        %807 = vmatprep.mubr.f32.mxu0 0.0
        %808 = vmatmul.mubr.f32.gmra.mxu0 %v710
        %v809 = vpop.f32.mrf.mxu0
        %v810 = vadd.f32 0.0, %v809
        %v811 = vpop.f32.mrf.mxu0
        %812 = vmatprep.mubr.f32.mxu0 0.0
        %813 = vmatmul.mubr.f32.gmra.mxu0 %v713
        %v814 = vpop.f32.mrf.mxu0
        %v815 = vadd.f32 0.0, %v814
        %v816 = vpop.f32.mrf.mxu0
        %817 = vmatprep.mubr.f32.mxu0 0.0
        %818 = vmatmul.mubr.f32.gmra.mxu0 %v716
        %v819 = vpop.f32.mrf.mxu0
        %v820 = vadd.f32 0.0, %v819
        %v821 = vpop.f32.mrf.mxu0
        %822 = vdwg.mxu0
        %v824 = vsel %vm564, %v548, 0
        %v827 = vsel %vm564, %v549, 0
        %v830 = vsel %vm564, %v550, 0
        %v833 = vsel %vm564, %v551, 0
        %v836 = vsel %vm564, %v552, 0
        %v839 = vsel %vm564, %v553, 0
        %v842 = vsel %vm564, %v554, 0
        %v845 = vsel %vm564, %v555, 0
        %847 = vmatprep.subr.mxu0 0.0
        %848 = vmatpush1.msra.mxu0 0.0
        %849 = vmatprep.subr.mxu0 0.0
        %850 = vmatpush1.msra.mxu0 0.0
        %851 = vmatprep.subr.mxu0 0.0
        %852 = vmatpush1.msra.mxu0 0.0
        %853 = vmatprep.subr.mxu0 0.0
        %854 = vmatpush1.msra.mxu0 0.0
        %855 = vmatprep.subr.mxu0 0.0
        %856 = vmatpush1.msra.mxu0 0.0
        %857 = vmatprep.subr.mxu0 0.0
        %858 = vmatpush1.msra.mxu0 0.0
        %859 = vmatprep.subr.mxu0 0.0
        %860 = vmatpush1.msra.mxu0 0.0
        %861 = vmatprep.subr.mxu0 0.0
        %862 = vmatpush1.msra.mxu0 0.0
        %863 = vmatprep.subr.mxu0 0.0
        %864 = vmatpush1.msra.mxu0 0.0
        %865 = vmatprep.subr.mxu0 0.0
        %866 = vmatpush1.msra.mxu0 0.0
        %867 = vmatprep.subr.mxu0 0.0
        %868 = vmatpush1.msra.mxu0 0.0
        %869 = vmatprep.subr.mxu0 0.0
        %870 = vmatpush1.msra.mxu0 0.0
        %871 = vmatprep.subr.mxu0 0.0
        %872 = vmatpush1.msra.mxu0 0.0
        %873 = vmatprep.subr.mxu0 0.0
        %874 = vmatpush1.msra.mxu0 0.0
        %875 = vmatprep.subr.mxu0 0.0
        %876 = vmatpush1.msra.mxu0 %v521
        %877 = vmatprep.subr.mxu0 0.0
        %878 = vmatpush1.msra.mxu0 %v518
        %879 = vmatprep.subr.mxu0 0.0
        %880 = vmatpush2.msra.mxu0 0.0
        %881 = vmatprep.subr.mxu0 0.0
        %882 = vmatpush2.msra.mxu0 0.0
        %883 = vmatprep.subr.mxu0 0.0
        %884 = vmatpush2.msra.mxu0 0.0
        %885 = vmatprep.subr.mxu0 0.0
        %886 = vmatpush2.msra.mxu0 0.0
        %887 = vmatprep.subr.mxu0 0.0
        %888 = vmatpush2.msra.mxu0 0.0
        %889 = vmatprep.subr.mxu0 0.0
        %890 = vmatpush2.msra.mxu0 0.0
        %891 = vmatprep.subr.mxu0 0.0
        %892 = vmatpush2.msra.mxu0 0.0
        %893 = vmatprep.subr.mxu0 0.0
        %894 = vmatpush2.msra.mxu0 0.0
        %895 = vmatprep.subr.mxu0 0.0
        %896 = vmatpush2.msra.mxu0 0.0
        %897 = vmatprep.subr.mxu0 0.0
        %898 = vmatpush2.msra.mxu0 0.0
        %899 = vmatprep.subr.mxu0 0.0
        %900 = vmatpush2.msra.mxu0 0.0
        %901 = vmatprep.subr.mxu0 0.0
        %902 = vmatpush2.msra.mxu0 0.0
        %903 = vmatprep.subr.mxu0 0.0
        %904 = vmatpush2.msra.mxu0 0.0
        %905 = vmatprep.subr.mxu0 0.0
        %906 = vmatpush2.msra.mxu0 0.0
        %907 = vmatprep.subr.mxu0 0.0
        %908 = vmatpush2.msra.mxu0 0.0
        %909 = vmatprep.subr.mxu0 0.0
        %910 = vmatpush2.msra.mxu0 0.0
        %911 = vmatprep.mubr.f32.mxu0 0.0
        %912 = vmatmul.mubr.f32.gmra.mxu0 %v824
        %v913 = vpop.f32.mrf.mxu0
        %v914 = vadd.f32 0.0, %v913
        %v915 = vpop.f32.mrf.mxu0
        %916 = vmatprep.mubr.f32.mxu0 0.0
        %917 = vmatmul.mubr.f32.gmra.mxu0 %v827
        %v918 = vpop.f32.mrf.mxu0
        %v919 = vadd.f32 0.0, %v918
        %v920 = vpop.f32.mrf.mxu0
        %921 = vmatprep.mubr.f32.mxu0 0.0
        %922 = vmatmul.mubr.f32.gmra.mxu0 %v830
        %v923 = vpop.f32.mrf.mxu0
        %v924 = vadd.f32 0.0, %v923
        %v925 = vpop.f32.mrf.mxu0
        %926 = vmatprep.mubr.f32.mxu0 0.0
        %927 = vmatmul.mubr.f32.gmra.mxu0 %v833
        %v928 = vpop.f32.mrf.mxu0
        %v929 = vadd.f32 0.0, %v928
        %v930 = vpop.f32.mrf.mxu0
        %931 = vmatprep.mubr.f32.mxu0 0.0
        %932 = vmatmul.mubr.f32.gmra.mxu0 %v836
        %v933 = vpop.f32.mrf.mxu0
        %v934 = vadd.f32 0.0, %v933
        %v935 = vpop.f32.mrf.mxu0
        %936 = vmatprep.mubr.f32.mxu0 0.0
        %937 = vmatmul.mubr.f32.gmra.mxu0 %v839
        %v938 = vpop.f32.mrf.mxu0
        %v939 = vadd.f32 0.0, %v938
        %v940 = vpop.f32.mrf.mxu0
        %941 = vmatprep.mubr.f32.mxu0 0.0
        %942 = vmatmul.mubr.f32.gmra.mxu0 %v842
        %v943 = vpop.f32.mrf.mxu0
        %v944 = vadd.f32 0.0, %v943
        %v945 = vpop.f32.mrf.mxu0
        %946 = vmatprep.mubr.f32.mxu0 0.0
        %947 = vmatmul.mubr.f32.gmra.mxu0 %v845
        %v948 = vpop.f32.mrf.mxu0
        %v949 = vadd.f32 0.0, %v948
        %v950 = vpop.f32.mrf.mxu0
        %951 = vdwg.mxu0
        %v953 = vsel %vm564, %v556, 0
        %v956 = vsel %vm564, %v557, 0
        %v959 = vsel %vm564, %v558, 0
        %v962 = vsel %vm564, %v559, 0
        %v965 = vsel %vm564, %v560, 0
        %v968 = vsel %vm564, %v561, 0
        %v971 = vsel %vm564, %v562, 0
        %v974 = vsel %vm564, %v563, 0
        %976 = vmatprep.subr.mxu0 0.0
        %977 = vmatpush1.msra.mxu0 0.0
        %978 = vmatprep.subr.mxu0 0.0
        %979 = vmatpush1.msra.mxu0 0.0
        %980 = vmatprep.subr.mxu0 0.0
        %981 = vmatpush1.msra.mxu0 0.0
        %982 = vmatprep.subr.mxu0 0.0
        %983 = vmatpush1.msra.mxu0 0.0
        %984 = vmatprep.subr.mxu0 0.0
        %985 = vmatpush1.msra.mxu0 0.0
        %986 = vmatprep.subr.mxu0 0.0
        %987 = vmatpush1.msra.mxu0 0.0
        %988 = vmatprep.subr.mxu0 0.0
        %989 = vmatpush1.msra.mxu0 0.0
        %990 = vmatprep.subr.mxu0 0.0
        %991 = vmatpush1.msra.mxu0 0.0
        %992 = vmatprep.subr.mxu0 0.0
        %993 = vmatpush1.msra.mxu0 0.0
        %994 = vmatprep.subr.mxu0 0.0
        %995 = vmatpush1.msra.mxu0 0.0
        %996 = vmatprep.subr.mxu0 0.0
        %997 = vmatpush1.msra.mxu0 0.0
        %998 = vmatprep.subr.mxu0 0.0
        %999 = vmatpush1.msra.mxu0 0.0
        %1000 = vmatprep.subr.mxu0 0.0
        %1001 = vmatpush1.msra.mxu0 0.0
        %1002 = vmatprep.subr.mxu0 0.0
        %1003 = vmatpush1.msra.mxu0 0.0
        %1004 = vmatprep.subr.mxu0 0.0
        %1005 = vmatpush1.msra.mxu0 %v529
        %1006 = vmatprep.subr.mxu0 0.0
        %1007 = vmatpush1.msra.mxu0 %v526
        %1008 = vmatprep.subr.mxu0 0.0
        %1009 = vmatpush2.msra.mxu0 0.0
        %1010 = vmatprep.subr.mxu0 0.0
        %1011 = vmatpush2.msra.mxu0 0.0
        %1012 = vmatprep.subr.mxu0 0.0
        %1013 = vmatpush2.msra.mxu0 0.0
        %1014 = vmatprep.subr.mxu0 0.0
        %1015 = vmatpush2.msra.mxu0 0.0
        %1016 = vmatprep.subr.mxu0 0.0
        %1017 = vmatpush2.msra.mxu0 0.0
        %1018 = vmatprep.subr.mxu0 0.0
        %1019 = vmatpush2.msra.mxu0 0.0
        %1020 = vmatprep.subr.mxu0 0.0
        %1021 = vmatpush2.msra.mxu0 0.0
        %1022 = vmatprep.subr.mxu0 0.0
        %1023 = vmatpush2.msra.mxu0 0.0
        %1024 = vmatprep.subr.mxu0 0.0
        %1025 = vmatpush2.msra.mxu0 0.0
        %1026 = vmatprep.subr.mxu0 0.0
        %1027 = vmatpush2.msra.mxu0 0.0
        %1028 = vmatprep.subr.mxu0 0.0
        %1029 = vmatpush2.msra.mxu0 0.0
        %1030 = vmatprep.subr.mxu0 0.0
        %1031 = vmatpush2.msra.mxu0 0.0
        %1032 = vmatprep.subr.mxu0 0.0
        %1033 = vmatpush2.msra.mxu0 0.0
        %1034 = vmatprep.subr.mxu0 0.0
        %1035 = vmatpush2.msra.mxu0 0.0
        %1036 = vmatprep.subr.mxu0 0.0
        %1037 = vmatpush2.msra.mxu0 0.0
        %1038 = vmatprep.subr.mxu0 0.0
        %1039 = vmatpush2.msra.mxu0 0.0
        %1040 = vmatprep.mubr.f32.mxu0 0.0
        %1041 = vmatmul.mubr.f32.gmra.mxu0 %v953
        %v1042 = vpop.f32.mrf.mxu0
        %v1043 = vadd.f32 0.0, %v1042
        %v1044 = vpop.f32.mrf.mxu0
        %1045 = vmatprep.mubr.f32.mxu0 0.0
        %1046 = vmatmul.mubr.f32.gmra.mxu0 %v956
        %v1047 = vpop.f32.mrf.mxu0
        %v1048 = vadd.f32 0.0, %v1047
        %v1049 = vpop.f32.mrf.mxu0
        %1050 = vmatprep.mubr.f32.mxu0 0.0
        %1051 = vmatmul.mubr.f32.gmra.mxu0 %v959
        %v1052 = vpop.f32.mrf.mxu0
        %v1053 = vadd.f32 0.0, %v1052
        %v1054 = vpop.f32.mrf.mxu0
        %1055 = vmatprep.mubr.f32.mxu0 0.0
        %1056 = vmatmul.mubr.f32.gmra.mxu0 %v962
        %v1057 = vpop.f32.mrf.mxu0
        %v1058 = vadd.f32 0.0, %v1057
        %v1059 = vpop.f32.mrf.mxu0
        %1060 = vmatprep.mubr.f32.mxu0 0.0
        %1061 = vmatmul.mubr.f32.gmra.mxu0 %v965
        %v1062 = vpop.f32.mrf.mxu0
        %v1063 = vadd.f32 0.0, %v1062
        %v1064 = vpop.f32.mrf.mxu0
        %1065 = vmatprep.mubr.f32.mxu0 0.0
        %1066 = vmatmul.mubr.f32.gmra.mxu0 %v968
        %v1067 = vpop.f32.mrf.mxu0
        %v1068 = vadd.f32 0.0, %v1067
        %v1069 = vpop.f32.mrf.mxu0
        %1070 = vmatprep.mubr.f32.mxu0 0.0
        %1071 = vmatmul.mubr.f32.gmra.mxu0 %v971
        %v1072 = vpop.f32.mrf.mxu0
        %v1073 = vadd.f32 0.0, %v1072
        %v1074 = vpop.f32.mrf.mxu0
        %1075 = vmatprep.mubr.f32.mxu0 0.0
        %1076 = vmatmul.mubr.f32.gmra.mxu0 %v974
        %v1077 = vpop.f32.mrf.mxu0
        %v1078 = vadd.f32 0.0, %v1077
        %v1079 = vpop.f32.mrf.mxu0
        %1080 = vdwg.mxu0
        %v1081 = vld [vmem:[%s4] sm:$0xff]
        %v1082 = vld [vmem:[%s4 + $0x8] sm:$0xff]
        %v1083 = vmul.f32 %v656, %v1081
        %v1084 = vmul.f32 %v661, %v1082
        %v1085 = vmul.f32 %v785, %v1081
        %v1086 = vmul.f32 %v790, %v1082
        %v1087 = vmul.f32 %v914, %v1081
        %v1088 = vmul.f32 %v919, %v1082
        %v1089 = vmul.f32 %v1043, %v1081
        %v1090 = vmul.f32 %v1048, %v1082
        %s1091 = scalar_lea.vmem %s4, 16
        %v1092 = vld [vmem:[%s1091] sm:$0xff]
        %v1093 = vld [vmem:[%s1091 + $0x8] sm:$0xff]
        %v1094 = vmul.f32 %v666, %v1092
        %v1095 = vmul.f32 %v671, %v1093
        %v1096 = vmul.f32 %v795, %v1092
        %v1097 = vmul.f32 %v800, %v1093
        %v1098 = vmul.f32 %v924, %v1092
        %v1099 = vmul.f32 %v929, %v1093
        %v1100 = vmul.f32 %v1053, %v1092
        %v1101 = vmul.f32 %v1058, %v1093
        %v1102 = vadd.f32 %v1083, %v1094
        %v1103 = vadd.f32 %v1084, %v1095
        %v1104 = vadd.f32 %v1085, %v1096
        %v1105 = vadd.f32 %v1086, %v1097
        %v1106 = vadd.f32 %v1087, %v1098
        %v1107 = vadd.f32 %v1088, %v1099
        %v1108 = vadd.f32 %v1089, %v1100
        %v1109 = vadd.f32 %v1090, %v1101
        %s1110 = scalar_lea.vmem %s4, 32
        %v1111 = vld [vmem:[%s1110] sm:$0xff]
        %v1112 = vld [vmem:[%s1110 + $0x8] sm:$0xff]
        %v1113 = vmul.f32 %v676, %v1111
        %v1114 = vmul.f32 %v681, %v1112
        %v1115 = vmul.f32 %v805, %v1111
        %v1116 = vmul.f32 %v810, %v1112
        %v1117 = vmul.f32 %v934, %v1111
        %v1118 = vmul.f32 %v939, %v1112
        %v1119 = vmul.f32 %v1063, %v1111
        %v1120 = vmul.f32 %v1068, %v1112
        %v1121 = vadd.f32 %v1102, %v1113
        %v1122 = vadd.f32 %v1103, %v1114
        %v1123 = vadd.f32 %v1104, %v1115
        %v1124 = vadd.f32 %v1105, %v1116
        %v1125 = vadd.f32 %v1106, %v1117
        %v1126 = vadd.f32 %v1107, %v1118
        %v1127 = vadd.f32 %v1108, %v1119
        %v1128 = vadd.f32 %v1109, %v1120
        %s1129 = scalar_lea.vmem %s4, 48
        %v1130 = vld [vmem:[%s1129] sm:$0xff]
        %v1131 = vld [vmem:[%s1129 + $0x8] sm:$0xff]
        %v1132 = vmul.f32 %v686, %v1130
        %v1133 = vmul.f32 %v691, %v1131
        %v1134 = vmul.f32 %v815, %v1130
        %v1135 = vmul.f32 %v820, %v1131
        %v1136 = vmul.f32 %v944, %v1130
        %v1137 = vmul.f32 %v949, %v1131
        %v1138 = vmul.f32 %v1073, %v1130
        %v1139 = vmul.f32 %v1078, %v1131
        %v1140 = vadd.f32 %v1121, %v1132
        %v1141 = vadd.f32 %v1122, %v1133
        %v1142 = vadd.f32 %v1123, %v1134
        %v1143 = vadd.f32 %v1124, %v1135
        %v1144 = vadd.f32 %v1125, %v1136
        %v1145 = vadd.f32 %v1126, %v1137
        %v1146 = vadd.f32 %v1127, %v1138
        %v1147 = vadd.f32 %v1128, %v1139
        %v1148 = vld [vmem:[%s5] sm:$0xff]
        %v1149 = vld [vmem:[%s5 + $0x8] sm:$0xff]
        %v1150 = vld [vmem:[%s5 + $0x10] sm:$0xff]
        %v1151 = vld [vmem:[%s5 + $0x18] sm:$0xff]
        %v1152 = vpack.c.bf16 %v1141, %v1140
        %v1153 = vpack.c.bf16 %v1143, %v1142
        %v1154 = vpack.c.bf16 %v1145, %v1144
        %v1155 = vpack.c.bf16 %v1147, %v1146
        %v1156 = vld [vmem:[%s6] sm:$0xff]
        %v1157 = vld [vmem:[%s6 + $0x8] sm:$0xff]
        %v1158 = vld [vmem:[%s6 + $0x10] sm:$0xff]
        %v1159 = vld [vmem:[%s6 + $0x18] sm:$0xff]
        %v1164 = vunpack.c.l.b16 %v1156
        %v1165 = vunpack.c.h.b16 %v1156
        %v1166 = vunpack.c.l.b16 %v1157
        %v1167 = vunpack.c.h.b16 %v1157
        %v1168 = vunpack.c.l.b16 %v1158
        %v1169 = vunpack.c.h.b16 %v1158
        %v1170 = vunpack.c.l.b16 %v1159
        %v1171 = vunpack.c.h.b16 %v1159
        %v1172 = vpack.c.b16 %v1166, %v1164
        %v1173 = vpack.c.b16 %v1167, %v1165
        %v1174 = vpack.c.b16 %v1170, %v1168
        %v1175 = vpack.c.b16 %v1171, %v1169
        %v1181 = vsel %vm454, %v1152, 0
        %v1184 = vsel %vm454, %v1153, 0
        %v1187 = vsel %vm454, %v1154, 0
        %v1190 = vsel %vm454, %v1155, 0
        %1192 = vmatprep.subr.bf16.mxu0 0
        %1193 = vmatpush1.bf16.msra.mxu0 0
        %1194 = vmatprep.subr.bf16.mxu0 0
        %1195 = vmatpush1.bf16.msra.mxu0 0
        %1196 = vmatprep.subr.bf16.mxu0 0
        %1197 = vmatpush1.bf16.msra.mxu0 0
        %1198 = vmatprep.subr.bf16.mxu0 0
        %1199 = vmatpush1.bf16.msra.mxu0 0
        %1200 = vmatprep.subr.bf16.mxu0 0
        %1201 = vmatpush1.bf16.msra.mxu0 0
        %1202 = vmatprep.subr.bf16.mxu0 0
        %1203 = vmatpush1.bf16.msra.mxu0 0
        %1204 = vmatprep.subr.bf16.mxu0 %v1175
        %1205 = vmatpush1.bf16.msra.mxu0 %v1174
        %1206 = vmatprep.subr.bf16.mxu0 %v1173
        %1207 = vmatpush1.bf16.msra.mxu0 %v1172
        %1208 = vmatprep.subr.bf16.mxu0 0
        %1209 = vmatpush2.bf16.msra.mxu0 0
        %1210 = vmatprep.subr.bf16.mxu0 0
        %1211 = vmatpush2.bf16.msra.mxu0 0
        %1212 = vmatprep.subr.bf16.mxu0 0
        %1213 = vmatpush2.bf16.msra.mxu0 0
        %1214 = vmatprep.subr.bf16.mxu0 0
        %1215 = vmatpush2.bf16.msra.mxu0 0
        %1216 = vmatprep.subr.bf16.mxu0 0
        %1217 = vmatpush2.bf16.msra.mxu0 0
        %1218 = vmatprep.subr.bf16.mxu0 0
        %1219 = vmatpush2.bf16.msra.mxu0 0
        %1220 = vmatprep.subr.bf16.mxu0 0
        %1221 = vmatpush2.bf16.msra.mxu0 0
        %1222 = vmatprep.subr.bf16.mxu0 0
        %1223 = vmatpush2.bf16.msra.mxu0 0
        %1224 = vmatprep.mubr.bf16.mxu0 0
        %1225 = vmatmul.mubr.bf16.gmra.mxu0 %v1181
        %v1226 = vpop.f32.mrf.mxu0
        %v1227 = vadd.f32 0.0, %v1226
        %v1228 = vpop.f32.mrf.mxu0
        %v1229 = vadd.f32 0.0, %v1228
        %v1230 = vpop.f32.mrf.mxu0
        %v1231 = vadd.f32 0.0, %v1230
        %v1232 = vpop.f32.mrf.mxu0
        %v1233 = vadd.f32 0.0, %v1232
        %1234 = vmatprep.mubr.bf16.mxu0 0
        %1235 = vmatmul.mubr.bf16.gmra.mxu0 %v1184
        %v1236 = vpop.f32.mrf.mxu0
        %v1237 = vadd.f32 0.0, %v1236
        %v1238 = vpop.f32.mrf.mxu0
        %v1239 = vadd.f32 0.0, %v1238
        %v1240 = vpop.f32.mrf.mxu0
        %v1241 = vadd.f32 0.0, %v1240
        %v1242 = vpop.f32.mrf.mxu0
        %v1243 = vadd.f32 0.0, %v1242
        %1244 = vmatprep.mubr.bf16.mxu0 0
        %1245 = vmatmul.mubr.bf16.gmra.mxu0 %v1187
        %v1246 = vpop.f32.mrf.mxu0
        %v1247 = vadd.f32 0.0, %v1246
        %v1248 = vpop.f32.mrf.mxu0
        %v1249 = vadd.f32 0.0, %v1248
        %v1250 = vpop.f32.mrf.mxu0
        %v1251 = vadd.f32 0.0, %v1250
        %v1252 = vpop.f32.mrf.mxu0
        %v1253 = vadd.f32 0.0, %v1252
        %1254 = vmatprep.mubr.bf16.mxu0 0
        %1255 = vmatmul.mubr.bf16.gmra.mxu0 %v1190
        %v1256 = vpop.f32.mrf.mxu0
        %v1257 = vadd.f32 0.0, %v1256
        %v1258 = vpop.f32.mrf.mxu0
        %v1259 = vadd.f32 0.0, %v1258
        %v1260 = vpop.f32.mrf.mxu0
        %v1261 = vadd.f32 0.0, %v1260
        %v1262 = vpop.f32.mrf.mxu0
        %v1263 = vadd.f32 0.0, %v1262
        %1264 = vdwg.mxu0
        %v1269 = vunpack.c.l.b16 %v1148
        %v1270 = vunpack.c.h.b16 %v1148
        %v1271 = vunpack.c.l.b16 %v1149
        %v1272 = vunpack.c.h.b16 %v1149
        %v1273 = vunpack.c.l.b16 %v1150
        %v1274 = vunpack.c.h.b16 %v1150
        %v1275 = vunpack.c.l.b16 %v1151
        %v1276 = vunpack.c.h.b16 %v1151
        %v1277 = vpack.c.b16 %v1271, %v1269
        %v1278 = vpack.c.b16 %v1272, %v1270
        %v1279 = vpack.c.b16 %v1275, %v1273
        %v1280 = vpack.c.b16 %v1276, %v1274
        %1285 = vmatprep.subr.bf16.mxu0 0
        %1286 = vmatpush1.bf16.msra.mxu0 0
        %1287 = vmatprep.subr.bf16.mxu0 0
        %1288 = vmatpush1.bf16.msra.mxu0 0
        %1289 = vmatprep.subr.bf16.mxu0 0
        %1290 = vmatpush1.bf16.msra.mxu0 0
        %1291 = vmatprep.subr.bf16.mxu0 0
        %1292 = vmatpush1.bf16.msra.mxu0 0
        %1293 = vmatprep.subr.bf16.mxu0 0
        %1294 = vmatpush1.bf16.msra.mxu0 0
        %1295 = vmatprep.subr.bf16.mxu0 0
        %1296 = vmatpush1.bf16.msra.mxu0 0
        %1297 = vmatprep.subr.bf16.mxu0 %v1280
        %1298 = vmatpush1.bf16.msra.mxu0 %v1279
        %1299 = vmatprep.subr.bf16.mxu0 %v1278
        %1300 = vmatpush1.bf16.msra.mxu0 %v1277
        %1301 = vmatprep.subr.bf16.mxu0 0
        %1302 = vmatpush2.bf16.msra.mxu0 0
        %1303 = vmatprep.subr.bf16.mxu0 0
        %1304 = vmatpush2.bf16.msra.mxu0 0
        %1305 = vmatprep.subr.bf16.mxu0 0
        %1306 = vmatpush2.bf16.msra.mxu0 0
        %1307 = vmatprep.subr.bf16.mxu0 0
        %1308 = vmatpush2.bf16.msra.mxu0 0
        %1309 = vmatprep.subr.bf16.mxu0 0
        %1310 = vmatpush2.bf16.msra.mxu0 0
        %1311 = vmatprep.subr.bf16.mxu0 0
        %1312 = vmatpush2.bf16.msra.mxu0 0
        %1313 = vmatprep.subr.bf16.mxu0 0
        %1314 = vmatpush2.bf16.msra.mxu0 0
        %1315 = vmatprep.subr.bf16.mxu0 0
        %1316 = vmatpush2.bf16.msra.mxu0 0
        %1317 = vmatprep.mubr.bf16.mxu0 0
        %1318 = vmatmul.mubr.bf16.gmra.mxu0 %v456
        %v1319 = vpop.f32.mrf.mxu0
        %v1320 = vadd.f32 %v1227, %v1319
        %v1321 = vpop.f32.mrf.mxu0
        %v1322 = vadd.f32 %v1229, %v1321
        %v1323 = vpop.f32.mrf.mxu0
        %v1324 = vadd.f32 %v1231, %v1323
        %v1325 = vpop.f32.mrf.mxu0
        %v1326 = vadd.f32 %v1233, %v1325
        %1327 = vmatprep.mubr.bf16.mxu0 0
        %1328 = vmatmul.mubr.bf16.gmra.mxu0 %v459
        %v1329 = vpop.f32.mrf.mxu0
        %v1330 = vadd.f32 %v1237, %v1329
        %v1331 = vpop.f32.mrf.mxu0
        %v1332 = vadd.f32 %v1239, %v1331
        %v1333 = vpop.f32.mrf.mxu0
        %v1334 = vadd.f32 %v1241, %v1333
        %v1335 = vpop.f32.mrf.mxu0
        %v1336 = vadd.f32 %v1243, %v1335
        %1337 = vmatprep.mubr.bf16.mxu0 0
        %1338 = vmatmul.mubr.bf16.gmra.mxu0 %v462
        %v1339 = vpop.f32.mrf.mxu0
        %v1340 = vadd.f32 %v1247, %v1339
        %v1341 = vpop.f32.mrf.mxu0
        %v1342 = vadd.f32 %v1249, %v1341
        %v1343 = vpop.f32.mrf.mxu0
        %v1344 = vadd.f32 %v1251, %v1343
        %v1345 = vpop.f32.mrf.mxu0
        %v1346 = vadd.f32 %v1253, %v1345
        %1347 = vmatprep.mubr.bf16.mxu0 0
        %1348 = vmatmul.mubr.bf16.gmra.mxu0 %v465
        %v1349 = vpop.f32.mrf.mxu0
        %v1350 = vadd.f32 %v1257, %v1349
        %v1351 = vpop.f32.mrf.mxu0
        %v1352 = vadd.f32 %v1259, %v1351
        %v1353 = vpop.f32.mrf.mxu0
        %v1354 = vadd.f32 %v1261, %v1353
        %v1355 = vpop.f32.mrf.mxu0
        %v1356 = vadd.f32 %v1263, %v1355
        %1357 = vdwg.mxu0
        %v1358 = vld [vmem:[%s7] sm:$0x3]
        %v1360 = vlaneseq
        %v1361 = vshrl.u32 %v1360, 7
        %v1362 = vsub.s32 0, %v1361
        %v1363 = vrot.slane %v1358, %v1362
        %v1364 = vlaneseq
        %v1365 = vshrl.u32 %v1364, 7
        %v1366 = vsub.s32 1, %v1365
        %v1367 = vrot.slane %v1358, %v1366
        %v1370 = vadd.f32 %v1320, %v1363
        %v1371 = vadd.f32 %v1322, %v1367
        %v1372 = vadd.f32 %v1324, %v1363
        %v1373 = vadd.f32 %v1326, %v1367
        %v1374 = vadd.f32 %v1330, %v1363
        %v1375 = vadd.f32 %v1332, %v1367
        %v1376 = vadd.f32 %v1334, %v1363
        %v1377 = vadd.f32 %v1336, %v1367
        %v1378 = vadd.f32 %v1340, %v1363
        %v1379 = vadd.f32 %v1342, %v1367
        %v1380 = vadd.f32 %v1344, %v1363
        %v1381 = vadd.f32 %v1346, %v1367
        %v1382 = vadd.f32 %v1350, %v1363
        %v1383 = vadd.f32 %v1352, %v1367
        %v1384 = vadd.f32 %v1354, %v1363
        %v1385 = vadd.f32 %v1356, %v1367
        %v1386 = vmul.f32 %v1370, 0.5
        %v1387 = vmul.f32 %v1371, 0.5
        %v1388 = vmul.f32 %v1372, 0.5
        %v1389 = vmul.f32 %v1373, 0.5
        %v1390 = vmul.f32 %v1374, 0.5
        %v1391 = vmul.f32 %v1375, 0.5
        %v1392 = vmul.f32 %v1376, 0.5
        %v1393 = vmul.f32 %v1377, 0.5
        %v1394 = vmul.f32 %v1378, 0.5
        %v1395 = vmul.f32 %v1379, 0.5
        %v1396 = vmul.f32 %v1380, 0.5
        %v1397 = vmul.f32 %v1381, 0.5
        %v1398 = vmul.f32 %v1382, 0.5
        %v1399 = vmul.f32 %v1383, 0.5
        %v1400 = vmul.f32 %v1384, 0.5
        %v1401 = vmul.f32 %v1385, 0.5
        %v1402 = vmul.f32 %v1370, 0.044715
        %v1403 = vmul.f32 %v1371, 0.044715
        %v1404 = vmul.f32 %v1372, 0.044715
        %v1405 = vmul.f32 %v1373, 0.044715
        %v1406 = vmul.f32 %v1374, 0.044715
        %v1407 = vmul.f32 %v1375, 0.044715
        %v1408 = vmul.f32 %v1376, 0.044715
        %v1409 = vmul.f32 %v1377, 0.044715
        %v1410 = vmul.f32 %v1378, 0.044715
        %v1411 = vmul.f32 %v1379, 0.044715
        %v1412 = vmul.f32 %v1380, 0.044715
        %v1413 = vmul.f32 %v1381, 0.044715
        %v1414 = vmul.f32 %v1382, 0.044715
        %v1415 = vmul.f32 %v1383, 0.044715
        %v1416 = vmul.f32 %v1384, 0.044715
        %v1417 = vmul.f32 %v1385, 0.044715
        %v1418 = vmul.f32 %v1402, %v1370
        %v1419 = vmul.f32 %v1403, %v1371
        %v1420 = vmul.f32 %v1404, %v1372
        %v1421 = vmul.f32 %v1405, %v1373
        %v1422 = vmul.f32 %v1406, %v1374
        %v1423 = vmul.f32 %v1407, %v1375
        %v1424 = vmul.f32 %v1408, %v1376
        %v1425 = vmul.f32 %v1409, %v1377
        %v1426 = vmul.f32 %v1410, %v1378
        %v1427 = vmul.f32 %v1411, %v1379
        %v1428 = vmul.f32 %v1412, %v1380
        %v1429 = vmul.f32 %v1413, %v1381
        %v1430 = vmul.f32 %v1414, %v1382
        %v1431 = vmul.f32 %v1415, %v1383
        %v1432 = vmul.f32 %v1416, %v1384
        %v1433 = vmul.f32 %v1417, %v1385
        %v1434 = vmul.f32 %v1418, %v1370
        %v1435 = vmul.f32 %v1419, %v1371
        %v1436 = vmul.f32 %v1420, %v1372
        %v1437 = vmul.f32 %v1421, %v1373
        %v1438 = vmul.f32 %v1422, %v1374
        %v1439 = vmul.f32 %v1423, %v1375
        %v1440 = vmul.f32 %v1424, %v1376
        %v1441 = vmul.f32 %v1425, %v1377
        %v1442 = vmul.f32 %v1426, %v1378
        %v1443 = vmul.f32 %v1427, %v1379
        %v1444 = vmul.f32 %v1428, %v1380
        %v1445 = vmul.f32 %v1429, %v1381
        %v1446 = vmul.f32 %v1430, %v1382
        %v1447 = vmul.f32 %v1431, %v1383
        %v1448 = vmul.f32 %v1432, %v1384
        %v1449 = vmul.f32 %v1433, %v1385
        %v1450 = vadd.f32 %v1370, %v1434
        %v1451 = vadd.f32 %v1371, %v1435
        %v1452 = vadd.f32 %v1372, %v1436
        %v1453 = vadd.f32 %v1373, %v1437
        %v1454 = vadd.f32 %v1374, %v1438
        %v1455 = vadd.f32 %v1375, %v1439
        %v1456 = vadd.f32 %v1376, %v1440
        %v1457 = vadd.f32 %v1377, %v1441
        %v1458 = vadd.f32 %v1378, %v1442
        %v1459 = vadd.f32 %v1379, %v1443
        %v1460 = vadd.f32 %v1380, %v1444
        %v1461 = vadd.f32 %v1381, %v1445
        %v1462 = vadd.f32 %v1382, %v1446
        %v1463 = vadd.f32 %v1383, %v1447
        %v1464 = vadd.f32 %v1384, %v1448
        %v1465 = vadd.f32 %v1385, %v1449
        %v1466 = vmul.f32 %v1450, 0.7978846
        %v1467 = vmul.f32 %v1451, 0.7978846
        %v1468 = vmul.f32 %v1452, 0.7978846
        %v1469 = vmul.f32 %v1453, 0.7978846
        %v1470 = vmul.f32 %v1454, 0.7978846
        %v1471 = vmul.f32 %v1455, 0.7978846
        %v1472 = vmul.f32 %v1456, 0.7978846
        %v1473 = vmul.f32 %v1457, 0.7978846
        %v1474 = vmul.f32 %v1458, 0.7978846
        %v1475 = vmul.f32 %v1459, 0.7978846
        %v1476 = vmul.f32 %v1460, 0.7978846
        %v1477 = vmul.f32 %v1461, 0.7978846
        %v1478 = vmul.f32 %v1462, 0.7978846
        %v1479 = vmul.f32 %v1463, 0.7978846
        %v1480 = vmul.f32 %v1464, 0.7978846
        %v1481 = vmul.f32 %v1465, 0.7978846
        %v1482 = vtanh.pop %v1466
        %v1483 = vtanh.pop %v1467
        %v1484 = vtanh.pop %v1468
        %v1485 = vtanh.pop %v1469
        %v1486 = vtanh.pop %v1470
        %v1487 = vtanh.pop %v1471
        %v1488 = vtanh.pop %v1472
        %v1489 = vtanh.pop %v1473
        %v1490 = vtanh.pop %v1474
        %v1491 = vtanh.pop %v1475
        %v1492 = vtanh.pop %v1476
        %v1493 = vtanh.pop %v1477
        %v1494 = vtanh.pop %v1478
        %v1495 = vtanh.pop %v1479
        %v1496 = vtanh.pop %v1480
        %v1497 = vtanh.pop %v1481
        %v1498 = vadd.f32 %v1482, 1.0
        %v1499 = vadd.f32 %v1483, 1.0
        %v1500 = vadd.f32 %v1484, 1.0
        %v1501 = vadd.f32 %v1485, 1.0
        %v1502 = vadd.f32 %v1486, 1.0
        %v1503 = vadd.f32 %v1487, 1.0
        %v1504 = vadd.f32 %v1488, 1.0
        %v1505 = vadd.f32 %v1489, 1.0
        %v1506 = vadd.f32 %v1490, 1.0
        %v1507 = vadd.f32 %v1491, 1.0
        %v1508 = vadd.f32 %v1492, 1.0
        %v1509 = vadd.f32 %v1493, 1.0
        %v1510 = vadd.f32 %v1494, 1.0
        %v1511 = vadd.f32 %v1495, 1.0
        %v1512 = vadd.f32 %v1496, 1.0
        %v1513 = vadd.f32 %v1497, 1.0
        %v1514 = vmul.f32 %v1386, %v1498
        %v1515 = vmul.f32 %v1387, %v1499
        %v1516 = vmul.f32 %v1388, %v1500
        %v1517 = vmul.f32 %v1389, %v1501
        %v1518 = vmul.f32 %v1390, %v1502
        %v1519 = vmul.f32 %v1391, %v1503
        %v1520 = vmul.f32 %v1392, %v1504
        %v1521 = vmul.f32 %v1393, %v1505
        %v1522 = vmul.f32 %v1394, %v1506
        %v1523 = vmul.f32 %v1395, %v1507
        %v1524 = vmul.f32 %v1396, %v1508
        %v1525 = vmul.f32 %v1397, %v1509
        %v1526 = vmul.f32 %v1398, %v1510
        %v1527 = vmul.f32 %v1399, %v1511
        %v1528 = vmul.f32 %v1400, %v1512
        %v1529 = vmul.f32 %v1401, %v1513
        %v1530 = vpack.c.bf16 %v1516, %v1514
        %v1531 = vpack.c.bf16 %v1517, %v1515
        %v1532 = vpack.c.bf16 %v1520, %v1518
        %v1533 = vpack.c.bf16 %v1521, %v1519
        %v1534 = vpack.c.bf16 %v1524, %v1522
        %v1535 = vpack.c.bf16 %v1525, %v1523
        %v1536 = vpack.c.bf16 %v1528, %v1526
        %v1537 = vpack.c.bf16 %v1529, %v1527
        %v1538 = vld [vmem:[%s8] sm:$0xf]
        %v1539 = vld [vmem:[%s8 + $0x4] sm:$0xf]
        %v1540 = vld [vmem:[%s8 + $0x8] sm:$0xf]
        %v1541 = vld [vmem:[%s8 + $0xc] sm:$0xf]
        %v1542 = vld [vmem:[%s8 + $0x10] sm:$0xf]
        %v1543 = vld [vmem:[%s8 + $0x14] sm:$0xf]
        %v1544 = vld [vmem:[%s8 + $0x18] sm:$0xf]
        %v1545 = vld [vmem:[%s8 + $0x1c] sm:$0xf]
        %v1546 = vld [vmem:[%s8 + $0x20] sm:$0xf]
        %v1547 = vld [vmem:[%s8 + $0x24] sm:$0xf]
        %v1548 = vld [vmem:[%s8 + $0x28] sm:$0xf]
        %v1549 = vld [vmem:[%s8 + $0x2c] sm:$0xf]
        %v1550 = vld [vmem:[%s8 + $0x30] sm:$0xf]
        %v1551 = vld [vmem:[%s8 + $0x34] sm:$0xf]
        %v1552 = vld [vmem:[%s8 + $0x38] sm:$0xf]
        %v1553 = vld [vmem:[%s8 + $0x3c] sm:$0xf]
        %v1554 = vld [vmem:[%s8 + $0x40] sm:$0xf]
        %v1555 = vld [vmem:[%s8 + $0x44] sm:$0xf]
        %v1556 = vld [vmem:[%s8 + $0x48] sm:$0xf]
        %v1557 = vld [vmem:[%s8 + $0x4c] sm:$0xf]
        %v1558 = vld [vmem:[%s8 + $0x50] sm:$0xf]
        %v1559 = vld [vmem:[%s8 + $0x54] sm:$0xf]
        %v1560 = vld [vmem:[%s8 + $0x58] sm:$0xf]
        %v1561 = vld [vmem:[%s8 + $0x5c] sm:$0xf]
        %v1562 = vld [vmem:[%s8 + $0x60] sm:$0xf]
        %v1563 = vld [vmem:[%s8 + $0x64] sm:$0xf]
        %v1564 = vld [vmem:[%s8 + $0x68] sm:$0xf]
        %v1565 = vld [vmem:[%s8 + $0x6c] sm:$0xf]
        %v1566 = vld [vmem:[%s8 + $0x70] sm:$0xf]
        %v1567 = vld [vmem:[%s8 + $0x74] sm:$0xf]
        %v1568 = vld [vmem:[%s8 + $0x78] sm:$0xf]
        %v1569 = vld [vmem:[%s8 + $0x7c] sm:$0xf]
        %v1570 = vld [vmem:[%s9] sm:$0x1]
        %v1572 = vlaneseq
        %v1573 = vshrl.u32 %v1572, 7
        %v1574 = vsub.s32 0, %v1573
        %v1575 = vrot.slane %v1570, %v1574
        %v1609 = vunpack.c.l.b16 %v1538
        %v1610 = vunpack.c.l.b16 %v1539
        %v1611 = vunpack.c.l.b16 %v1540
        %v1612 = vunpack.c.l.b16 %v1541
        %v1613 = vunpack.c.l.b16 %v1542
        %v1614 = vunpack.c.l.b16 %v1543
        %v1615 = vunpack.c.l.b16 %v1544
        %v1616 = vunpack.c.l.b16 %v1545
        %v1617 = vunpack.c.l.b16 %v1546
        %v1618 = vunpack.c.l.b16 %v1547
        %v1619 = vunpack.c.l.b16 %v1548
        %v1620 = vunpack.c.l.b16 %v1549
        %v1621 = vunpack.c.l.b16 %v1550
        %v1622 = vunpack.c.l.b16 %v1551
        %v1623 = vunpack.c.l.b16 %v1552
        %v1624 = vunpack.c.l.b16 %v1553
        %v1625 = vunpack.c.l.b16 %v1554
        %v1626 = vunpack.c.l.b16 %v1555
        %v1627 = vunpack.c.l.b16 %v1556
        %v1628 = vunpack.c.l.b16 %v1557
        %v1629 = vunpack.c.l.b16 %v1558
        %v1630 = vunpack.c.l.b16 %v1559
        %v1631 = vunpack.c.l.b16 %v1560
        %v1632 = vunpack.c.l.b16 %v1561
        %v1633 = vunpack.c.l.b16 %v1562
        %v1634 = vunpack.c.l.b16 %v1563
        %v1635 = vunpack.c.l.b16 %v1564
        %v1636 = vunpack.c.l.b16 %v1565
        %v1637 = vunpack.c.l.b16 %v1566
        %v1638 = vunpack.c.l.b16 %v1567
        %v1639 = vunpack.c.l.b16 %v1568
        %v1640 = vunpack.c.l.b16 %v1569
        %v1641 = vpack.c.b16 %v1610, %v1609
        %v1642 = vpack.c.b16 %v1612, %v1611
        %v1643 = vpack.c.b16 %v1614, %v1613
        %v1644 = vpack.c.b16 %v1616, %v1615
        %v1645 = vpack.c.b16 %v1618, %v1617
        %v1646 = vpack.c.b16 %v1620, %v1619
        %v1647 = vpack.c.b16 %v1622, %v1621
        %v1648 = vpack.c.b16 %v1624, %v1623
        %v1649 = vpack.c.b16 %v1626, %v1625
        %v1650 = vpack.c.b16 %v1628, %v1627
        %v1651 = vpack.c.b16 %v1630, %v1629
        %v1652 = vpack.c.b16 %v1632, %v1631
        %v1653 = vpack.c.b16 %v1634, %v1633
        %v1654 = vpack.c.b16 %v1636, %v1635
        %v1655 = vpack.c.b16 %v1638, %v1637
        %v1656 = vpack.c.b16 %v1640, %v1639
        %1673 = vmatprep.subr.bf16.mxu0 0
        %1674 = vmatpush1.bf16.msra.mxu0 %v1648
        %1675 = vmatprep.subr.bf16.mxu0 0
        %1676 = vmatpush1.bf16.msra.mxu0 %v1647
        %1677 = vmatprep.subr.bf16.mxu0 0
        %1678 = vmatpush1.bf16.msra.mxu0 %v1646
        %1679 = vmatprep.subr.bf16.mxu0 0
        %1680 = vmatpush1.bf16.msra.mxu0 %v1645
        %1681 = vmatprep.subr.bf16.mxu0 0
        %1682 = vmatpush1.bf16.msra.mxu0 %v1644
        %1683 = vmatprep.subr.bf16.mxu0 0
        %1684 = vmatpush1.bf16.msra.mxu0 %v1643
        %1685 = vmatprep.subr.bf16.mxu0 0
        %1686 = vmatpush1.bf16.msra.mxu0 %v1642
        %1687 = vmatprep.subr.bf16.mxu0 0
        %1688 = vmatpush1.bf16.msra.mxu0 %v1641
        %1689 = vmatprep.subr.bf16.mxu0 0
        %1690 = vmatpush2.bf16.msra.mxu0 %v1656
        %1691 = vmatprep.subr.bf16.mxu0 0
        %1692 = vmatpush2.bf16.msra.mxu0 %v1655
        %1693 = vmatprep.subr.bf16.mxu0 0
        %1694 = vmatpush2.bf16.msra.mxu0 %v1654
        %1695 = vmatprep.subr.bf16.mxu0 0
        %1696 = vmatpush2.bf16.msra.mxu0 %v1653
        %1697 = vmatprep.subr.bf16.mxu0 0
        %1698 = vmatpush2.bf16.msra.mxu0 %v1652
        %1699 = vmatprep.subr.bf16.mxu0 0
        %1700 = vmatpush2.bf16.msra.mxu0 %v1651
        %1701 = vmatprep.subr.bf16.mxu0 0
        %1702 = vmatpush2.bf16.msra.mxu0 %v1650
        %1703 = vmatprep.subr.bf16.mxu0 0
        %1704 = vmatpush2.bf16.msra.mxu0 %v1649
        %1705 = vmatprep.mubr.bf16.mxu0 %v1531
        %1706 = vmatmul.mubr.bf16.gmra.mxu0 %v1530
        %v1707 = vpop.f32.mrf.mxu0
        %v1708 = vadd.f32 %v1575, %v1707
        %v1709 = vpop.f32.mrf.mxu0
        %v1710 = vpop.f32.mrf.mxu0
        %v1711 = vadd.f32 %v1575, %v1710
        %v1712 = vpop.f32.mrf.mxu0
        %1713 = vmatprep.mubr.bf16.mxu0 %v1533
        %1714 = vmatmul.mubr.bf16.gmra.mxu0 %v1532
        %v1715 = vpop.f32.mrf.mxu0
        %v1716 = vadd.f32 %v1575, %v1715
        %v1717 = vpop.f32.mrf.mxu0
        %v1718 = vpop.f32.mrf.mxu0
        %v1719 = vadd.f32 %v1575, %v1718
        %v1720 = vpop.f32.mrf.mxu0
        %1721 = vmatprep.mubr.bf16.mxu0 %v1535
        %1722 = vmatmul.mubr.bf16.gmra.mxu0 %v1534
        %v1723 = vpop.f32.mrf.mxu0
        %v1724 = vadd.f32 %v1575, %v1723
        %v1725 = vpop.f32.mrf.mxu0
        %v1726 = vpop.f32.mrf.mxu0
        %v1727 = vadd.f32 %v1575, %v1726
        %v1728 = vpop.f32.mrf.mxu0
        %1729 = vmatprep.mubr.bf16.mxu0 %v1537
        %1730 = vmatmul.mubr.bf16.gmra.mxu0 %v1536
        %v1731 = vpop.f32.mrf.mxu0
        %v1732 = vadd.f32 %v1575, %v1731
        %v1733 = vpop.f32.mrf.mxu0
        %v1734 = vpop.f32.mrf.mxu0
        %v1735 = vadd.f32 %v1575, %v1734
        %v1736 = vpop.f32.mrf.mxu0
        %1737 = vdwg.mxu0
        %v1738 = vadd.f32 %v1708, %v419
        %v1739 = vadd.f32 %v1711, %v420
        %v1740 = vadd.f32 %v1716, %v421
        %v1741 = vadd.f32 %v1719, %v422
        %v1742 = vadd.f32 %v1724, %v423
        %v1743 = vadd.f32 %v1727, %v424
        %v1744 = vadd.f32 %v1732, %v425
        %v1745 = vadd.f32 %v1735, %v426
        %v1746 = vld [vmem:[%s10] sm:$0x1]
        %v1748 = vlaneseq
        %v1749 = vshrl.u32 %v1748, 7
        %v1750 = vsub.s32 0, %v1749
        %v1751 = vrot.slane %v1746, %v1750
        %v1753 = vmul.f32 %v1738, %v1751
        %v1754 = vmul.f32 %v1739, %v1751
        %v1755 = vmul.f32 %v1740, %v1751
        %v1756 = vmul.f32 %v1741, %v1751
        %v1757 = vmul.f32 %v1742, %v1751
        %v1758 = vmul.f32 %v1743, %v1751
        %v1759 = vmul.f32 %v1744, %v1751
        %v1760 = vmul.f32 %v1745, %v1751
        %v1761 = vld [vmem:[%s11] sm:$0x1]
        %v1763 = vlaneseq
        %v1764 = vshrl.u32 %v1763, 7
        %v1765 = vsub.s32 0, %v1764
        %v1766 = vrot.slane %v1761, %v1765
        %v1768 = vadd.f32 %v1753, %v1766
        %v1769 = vadd.f32 %v1754, %v1766
        %v1770 = vadd.f32 %v1755, %v1766
        %v1771 = vadd.f32 %v1756, %v1766
        %v1772 = vadd.f32 %v1757, %v1766
        %v1773 = vadd.f32 %v1758, %v1766
        %v1774 = vadd.f32 %v1759, %v1766
        %v1775 = vadd.f32 %v1760, %v1766
        %1776 = vst.msk [vmem:[%s409] sm:$0xff] %vm454, %v1768
        %1777 = vst.msk [vmem:[%s409 + $0x8] sm:$0xff] %vm454, %v1769
        %1778 = vst.msk [vmem:[%s409 + $0x10] sm:$0xff] %vm454, %v1770
        %1779 = vst.msk [vmem:[%s409 + $0x18] sm:$0xff] %vm454, %v1771
        %1780 = vst.msk [vmem:[%s409 + $0x20] sm:$0xff] %vm454, %v1772
        %1781 = vst.msk [vmem:[%s409 + $0x28] sm:$0xff] %vm454, %v1773
        %1782 = vst.msk [vmem:[%s409 + $0x30] sm:$0xff] %vm454, %v1774
        %1783 = vst.msk [vmem:[%s409 + $0x38] sm:$0xff] %vm454, %v1775
        %s1784 = sand.u32 %s291, 1
        %s1785 = scalar_lea.sflag [#allocation3], %s1784
        %s1786 = sand.u32 %s291, 1
        %s1787 = smul.addr %s1786, 64
        %s1788 = scalar_lea.vmem [#allocation2], %s1787
        // Predicated region
        $region69: #{spatial_decom_forward.1} parent=67 // pred_check
          %p1789 = pneg %p301
        $region70: #{spatial_decom_forward.1} parent=67 // pred_check_branch
          %1791 = sbr.rel (%p1789) target = $region72
        $region71: #{spatial_decom_forward.1} parent=67 // pred_region
          %s1792 = smul.u32 4, %s26
          %s1794 = ssub.s32 1024, 1024
          %1795 = vsyncadd %s1785, %s1794
          %s1796 = smul.addr %s1792, 2
          %s1797 = smul.addr %s1796, 128
          %s1798 = scalar_lea.hbm %s12, %s1797
          %s1799 = sshll.u32 %s1788, 4
          %s1800 = int_to_ptr.vmem [resolvable:$true] %s1799
          %1805 = dma.vmem_to_hbm [thread:$0]  %s1800, 1024, %s1798, %s1785, 128, 128, 8
        $region72: #{spatial_decom_forward.1} parent=67 // pred_fallthru
          _
      $region68: #{spatial_decom_forward.1} parent=5 // pred_fallthru
        _
      %p1806 = scmp.le.s32.totalorder 2, %s21
      // Predicated region
      $region73: #{spatial_decom_forward.1} parent=5 // pred_check
        %p1807 = pneg %p1806
      $region74: #{spatial_decom_forward.1} parent=5 // pred_check_branch
        %1809 = sbr.rel (%p1807) target = $region76
      $region75: #{spatial_decom_forward.1} parent=5 // pred_region
        %s1810 = ssub.s32 %s21, 2
        // Predicated region
        $region77: #{spatial_decom_forward.1} parent=75 // pred_check
          %p1811 = pneg %p307
        $region78: #{spatial_decom_forward.1} parent=75 // pred_check_branch
          %1813 = sbr.rel (%p1811) target = $region80
        $region79: #{spatial_decom_forward.1} parent=75 // pred_region
          %s1814 = sand.u32 %s292, 1
          %s1815 = scalar_lea.sflag [#allocation3], %s1814
          %s1816 = sand.u32 %s292, 1
          %s1817 = smul.addr %s1816, 64
          %s1818 = scalar_lea.vmem [#allocation2], %s1817
          %1819 = dma.done %s1815, 1024
        $region80: #{spatial_decom_forward.1} parent=75 // pred_fallthru
          _
      $region76: #{spatial_decom_forward.1} parent=5 // pred_fallthru
        _
    $region6: #{spatial_decom_forward.1} parent=1 // loop_footer
      %s25 = sadd.s32 1, %s21
    $region7: #{spatial_decom_forward.1} parent=1 // loop_footer_branch
      %20 = sbr.rel target = $region3
    $region8: #{spatial_decom_forward.1} parent=1 // loop_exit
      _
    %1820 = vsyncpa [#allocation3], 1
    %s1821 = scalar_lea.sflag [#allocation3], 1
    %1822 = vsyncpa %s1821, 1

</llo_original>
